<compile_context>
chip_gen: v5e
topology: v5e:2x2
jax: 0.10.0
libtpu: 0.0.40
codegen_flags: <defaults>
</compile_context>

<pallas_src>
import jax
import jax.numpy as jnp
from jax import lax
from jax.experimental import pallas as pl
from jax.experimental.pallas import tpu as pltpu

# ---------------- problem sizes (small, synthetic) ----------------
B = 8        # batch
D = 16       # data / latent dim
H = 32       # hidden dim of the odefunc MLP
T = 1.0      # integration end time (sqrt_end_time ** 2)
N_STEPS = 8  # fixed RK4 steps replacing dopri5

_DT = float(T) / N_STEPS
_HALF_DT = 0.5 * _DT
_SIXTH_DT = _DT / 6.0


def _cnf_kernel_with_logp(z_ref, logpz_ref, w1_ref, wt_ref, b1_ref, w2_ref,
                          b2_ref, ccol_ref, csum_ref, zt_ref, logpt_ref):
    """Integrate (z, logpz) from t=0 to t=T with fully-unrolled RK4."""
    tb = z_ref.shape[0]
    d = z_ref.shape[1]
    h_dim = w1_ref.shape[1]

    z0 = z_ref[...].astype(jnp.float32)
    lp0 = logpz_ref[...].astype(jnp.float32)

    w1 = w1_ref[...].astype(jnp.float32)
    w2 = w2_ref[...].astype(jnp.float32)
    ccol = ccol_ref[...].astype(jnp.float32)          # (H, 1)

    # Hoist (1, X) row-vector broadcasts once -- JAX does not CSE broadcasts.
    wt_b = jnp.broadcast_to(wt_ref[...].astype(jnp.float32), (tb, h_dim))
    b1_b = jnp.broadcast_to(b1_ref[...].astype(jnp.float32), (tb, h_dim))
    b2_b = jnp.broadcast_to(b2_ref[...].astype(jnp.float32), (tb, d))
    csum_b = jnp.broadcast_to(csum_ref[...].astype(jnp.float32), (tb, 1))

    dt = jnp.float32(_DT)
    half_dt = jnp.float32(_HALF_DT)
    sixth_dt = jnp.float32(_SIXTH_DT)

    def f(bias, z):
        h = jnp.tanh(jnp.dot(z, w1, preferred_element_type=jnp.float32) + bias)
        dz = jnp.dot(h, w2, preferred_element_type=jnp.float32) + b2_b
        # dlogp/dt = -trace(J) = -(1 - h^2)@c = (h*h)@c - sum(c)   (on the MXU)
        dlp = jnp.dot(h * h, ccol, preferred_element_type=jnp.float32) - csum_b
        return dz, dlp

    def rk4_step(i, carry):
        z, lp = carry
        t = i.astype(jnp.float32) * dt
        # The 3 distinct per-stage biases depend only on t, not z: compute them
        # up front so they overlap with the z-dependent matmul chain.
        bias_a = t * wt_b + b1_b
        bias_b = (t + half_dt) * wt_b + b1_b
        bias_c = (t + dt) * wt_b + b1_b
        k1z, k1l = f(bias_a, z)
        k2z, k2l = f(bias_b, z + half_dt * k1z)
        k3z, k3l = f(bias_b, z + half_dt * k2z)
        k4z, k4l = f(bias_c, z + dt * k3z)
        z = z + sixth_dt * (k1z + 2.0 * (k2z + k3z) + k4z)
        lp = lp + sixth_dt * (k1l + 2.0 * (k2l + k3l) + k4l)
        return z, lp

    z_t, lp_t = lax.fori_loop(0, N_STEPS, rk4_step, (z0, lp0), unroll=True)
    zt_ref[...] = z_t.astype(zt_ref.dtype)
    logpt_ref[...] = lp_t.astype(logpt_ref.dtype)


def _cnf_kernel_no_logp(z_ref, w1_ref, wt_ref, b1_ref, w2_ref, b2_ref, zt_ref):
    """logpz=None path: integrate z only (no divergence / logp chain)."""
    tb = z_ref.shape[0]
    d = z_ref.shape[1]
    h_dim = w1_ref.shape[1]

    z0 = z_ref[...].astype(jnp.float32)
    w1 = w1_ref[...].astype(jnp.float32)
    w2 = w2_ref[...].astype(jnp.float32)

    wt_b = jnp.broadcast_to(wt_ref[...].astype(jnp.float32), (tb, h_dim))
    b1_b = jnp.broadcast_to(b1_ref[...].astype(jnp.float32), (tb, h_dim))
    b2_b = jnp.broadcast_to(b2_ref[...].astype(jnp.float32), (tb, d))

    dt = jnp.float32(_DT)
    half_dt = jnp.float32(_HALF_DT)
    sixth_dt = jnp.float32(_SIXTH_DT)

    def f(bias, z):
        h = jnp.tanh(jnp.dot(z, w1, preferred_element_type=jnp.float32) + bias)
        return jnp.dot(h, w2, preferred_element_type=jnp.float32) + b2_b

    def rk4_step(i, z):
        t = i.astype(jnp.float32) * dt
        bias_a = t * wt_b + b1_b
        bias_b = (t + half_dt) * wt_b + b1_b
        bias_c = (t + dt) * wt_b + b1_b
        k1z = f(bias_a, z)
        k2z = f(bias_b, z + half_dt * k1z)
        k3z = f(bias_b, z + half_dt * k2z)
        k4z = f(bias_c, z + dt * k3z)
        return z + sixth_dt * (k1z + 2.0 * (k2z + k3z) + k4z)

    z_t = lax.fori_loop(0, N_STEPS, rk4_step, z0, unroll=True)
    zt_ref[...] = z_t.astype(zt_ref.dtype)


def cnf_forward(z, params, logpz=None):
    """Mirrors CNF.forward(z, logpz=None, reverse=False) at eval time.

    Returns z_t if logpz is None, else (z_t, logpz_t).
    """
    w1, wt, b1, w2, b2 = params
    bz, dz = z.shape
    hh = w1.shape[1]

    # Tile the (independent) batch rows over a parallel grid axis.
    tb = bz if bz <= 128 else 128
    assert bz % tb == 0, "batch must be a multiple of the batch tile"
    grid = (bz // tb,)

    z_spec = pl.BlockSpec((tb, dz), lambda i: (i, 0))
    lp_spec = pl.BlockSpec((tb, 1), lambda i: (i, 0))
    weight_specs = [
        pl.BlockSpec((dz, hh), lambda i: (0, 0)),   # W1 (D, H)
        pl.BlockSpec((1, hh), lambda i: (0, 0)),    # wt (1, H)
        pl.BlockSpec((1, hh), lambda i: (0, 0)),    # b1 (1, H)
        pl.BlockSpec((hh, dz), lambda i: (0, 0)),   # W2 (H, D)
        pl.BlockSpec((1, dz), lambda i: (0, 0)),    # b2 (1, D)
    ]
    cparams = pltpu.CompilerParams(dimension_semantics=("parallel",))

    if logpz is None:
        z_t = pl.pallas_call(
            _cnf_kernel_no_logp,
            out_shape=jax.ShapeDtypeStruct(z.shape, z.dtype),
            grid=grid,
            in_specs=[z_spec] + weight_specs,
            out_specs=z_spec,
            compiler_params=cparams,
        )(z, w1, wt, b1, w2, b2)
        return z_t

    # Exact-trace contraction vector c[k] = sum_i W1[i,k] * W2[k,i], laid out as
    # a column (H, 1) so the divergence reduction runs on the MXU, plus its sum.
    ccol = jnp.sum(w1 * w2.T, axis=0)[:, None].astype(jnp.float32)   # (H, 1)
    csum = jnp.sum(ccol).reshape(1, 1).astype(jnp.float32)           # (1, 1)

    z_t, logpz_t = pl.pallas_call(
        _cnf_kernel_with_logp,
        out_shape=(
            jax.ShapeDtypeStruct(z.shape, z.dtype),
            jax.ShapeDtypeStruct((bz, 1), z.dtype),
        ),
        grid=grid,
        in_specs=[z_spec, lp_spec] + weight_specs + [
            pl.BlockSpec((hh, 1), lambda i: (0, 0)),    # c column (H, 1)
            pl.BlockSpec((1, 1), lambda i: (0, 0)),     # sum(c)   (1, 1)
        ],
        out_specs=(z_spec, lp_spec),
        compiler_params=cparams,
    )(z, logpz, w1, wt, b1, w2, b2, ccol, csum)
    return z_t, logpz_t


def _reference(z, params, logpz):
    """Pure-JAX RK4 reference for a quick sanity check."""
    w1, wt, b1, w2, b2 = params
    c = jnp.sum(w1 * w2.T, axis=0, keepdims=True)

    def f(t, z):
        h = jnp.tanh(z @ w1 + t * wt + b1)
        dz = h @ w2 + b2
        div = jnp.sum((1.0 - h * h) * c, axis=-1, keepdims=True)
        return dz, -div

    dt = T / N_STEPS
    lp = logpz
    for i in range(N_STEPS):
        t = i * dt
        k1z, k1l = f(t, z)
        k2z, k2l = f(t + dt / 2, z + dt / 2 * k1z)
        k3z, k3l = f(t + dt / 2, z + dt / 2 * k2z)
        k4z, k4l = f(t + dt, z + dt * k3z)
        z = z + dt / 6 * (k1z + 2 * k2z + 2 * k3z + k4z)
        lp = lp + dt / 6 * (k1l + 2 * k2l + 2 * k3l + k4l)
    return z, lp


if __name__ == "__main__":
    key = jax.random.PRNGKey(0)
    k_z, k_w1, k_wt, k_b1, k_w2, k_b2 = jax.random.split(key, 6)

    z = jax.random.normal(k_z, (B, D), dtype=jnp.float32)

    # Deterministic odefunc parameters (synthetic init, small scale).
    w1 = 0.2 * jax.random.normal(k_w1, (D, H), dtype=jnp.float32)
    wt = 0.2 * jax.random.normal(k_wt, (1, H), dtype=jnp.float32)
    b1 = 0.05 * jax.random.normal(k_b1, (1, H), dtype=jnp.float32)
    w2 = 0.2 * jax.random.normal(k_w2, (H, D), dtype=jnp.float32)
    b2 = 0.05 * jax.random.normal(k_b2, (1, D), dtype=jnp.float32)
    params = (w1, wt, b1, w2, b2)

    # logpz=None path: module returns only z_t (logp chain skipped in-kernel).
    z_t = cnf_forward(z, params, logpz=None)
    jax.block_until_ready(z_t)

    # logpz provided path: module returns (z_t, logpz_t).
    logpz0 = jnp.zeros((B, 1), jnp.float32)
    z_t2, logpz_t = cnf_forward(z, params, logpz=logpz0)
    jax.block_until_ready((z_t2, logpz_t))

    # sanity check against pure-JAX RK4
    z_ref, lp_ref = _reference(z, params, logpz0)
    assert jnp.allclose(z_t, z_ref, atol=1e-4, rtol=1e-4)
    assert jnp.allclose(z_t2, z_ref, atol=1e-4, rtol=1e-4)
    assert jnp.allclose(logpz_t, lp_ref, atol=1e-4, rtol=1e-4)

    print("KERNEL_OK")
</pallas_src>

<mosaic_0001>
module attributes {stable_mosaic.version = 11 : i64} {
  func.func @_cnf_kernel_no_logp(%arg0: i32, %arg1: memref<8x16xf32, #tpu.memory_space<vmem>>, %arg2: memref<16x32xf32, #tpu.memory_space<vmem>>, %arg3: memref<1x32xf32, #tpu.memory_space<vmem>>, %arg4: memref<1x32xf32, #tpu.memory_space<vmem>>, %arg5: memref<32x16xf32, #tpu.memory_space<vmem>>, %arg6: memref<1x16xf32, #tpu.memory_space<vmem>>, %arg7: memref<8x16xf32, #tpu.memory_space<vmem>>) attributes {dimension_semantics = [#tpu.dimension_semantics<parallel>], iteration_bounds = array<i64: 1>, scalar_prefetch = 0 : i64, scratch_operands = 0 : i64, tpu.core_type = #tpu.core_type<tc>, window_params = [{transform_indices = @transform_0, window_bounds = array<i64: 8, 16>}, {pipeline_mode = #tpu.pipeline_mode<synchronous>, transform_indices = @transform_1, window_bounds = array<i64: 16, 32>}, {pipeline_mode = #tpu.pipeline_mode<synchronous>, transform_indices = @transform_2, window_bounds = array<i64: 1, 32>}, {pipeline_mode = #tpu.pipeline_mode<synchronous>, transform_indices = @transform_3, window_bounds = array<i64: 1, 32>}, {pipeline_mode = #tpu.pipeline_mode<synchronous>, transform_indices = @transform_4, window_bounds = array<i64: 32, 16>}, {pipeline_mode = #tpu.pipeline_mode<synchronous>, transform_indices = @transform_5, window_bounds = array<i64: 1, 16>}, {transform_indices = @transform_6, window_bounds = array<i64: 8, 16>}]} {
    %c0 = arith.constant 0 : index
    %c0_0 = arith.constant 0 : index
    %0 = vector.load %arg1[%c0, %c0_0] : memref<8x16xf32, #tpu.memory_space<vmem>>, vector<8x16xf32>
    %c0_1 = arith.constant 0 : index
    %c0_2 = arith.constant 0 : index
    %1 = vector.load %arg2[%c0_1, %c0_2] : memref<16x32xf32, #tpu.memory_space<vmem>>, vector<16x32xf32>
    %c0_3 = arith.constant 0 : index
    %c0_4 = arith.constant 0 : index
    %2 = vector.load %arg5[%c0_3, %c0_4] : memref<32x16xf32, #tpu.memory_space<vmem>>, vector<32x16xf32>
    %c0_5 = arith.constant 0 : index
    %c0_6 = arith.constant 0 : index
    %3 = vector.load %arg3[%c0_5, %c0_6] : memref<1x32xf32, #tpu.memory_space<vmem>>, vector<1x32xf32>
    %4 = vector.shape_cast %3 : vector<1x32xf32> to vector<1x32xf32>
    %5 = vector.broadcast %4 : vector<1x32xf32> to vector<8x32xf32>
    %c0_7 = arith.constant 0 : index
    %c0_8 = arith.constant 0 : index
    %6 = vector.load %arg4[%c0_7, %c0_8] : memref<1x32xf32, #tpu.memory_space<vmem>>, vector<1x32xf32>
    %7 = vector.shape_cast %6 : vector<1x32xf32> to vector<1x32xf32>
    %8 = vector.broadcast %7 : vector<1x32xf32> to vector<8x32xf32>
    %c0_9 = arith.constant 0 : index
    %c0_10 = arith.constant 0 : index
    %9 = vector.load %arg6[%c0_9, %c0_10] : memref<1x16xf32, #tpu.memory_space<vmem>>, vector<1x16xf32>
    %10 = vector.shape_cast %9 : vector<1x16xf32> to vector<1x16xf32>
    %11 = vector.broadcast %10 : vector<1x16xf32> to vector<8x16xf32>
    %cst = arith.constant 1.250000e-01 : f32
    %cst_11 = arith.constant 6.250000e-02 : f32
    %cst_12 = arith.constant 0.020833334 : f32
    %c0_i32 = arith.constant 0 : i32
    %12 = arith.sitofp %c0_i32 : i32 to f32
    %13 = arith.mulf %12, %cst : f32
    %14 = vector.broadcast %13 : f32 to vector<8x32xf32>
    %15 = arith.mulf %14, %5 : vector<8x32xf32>
    %16 = arith.addf %15, %8 : vector<8x32xf32>
    %17 = arith.addf %13, %cst_11 : f32
    %18 = vector.broadcast %17 : f32 to vector<8x32xf32>
    %19 = arith.mulf %18, %5 : vector<8x32xf32>
    %20 = arith.addf %19, %8 : vector<8x32xf32>
    %21 = arith.addf %13, %cst : f32
    %22 = vector.broadcast %21 : f32 to vector<8x32xf32>
    %23 = arith.mulf %22, %5 : vector<8x32xf32>
    %24 = arith.addf %23, %8 : vector<8x32xf32>
    %cst_13 = arith.constant dense<0.000000e+00> : vector<8x32xf32>
    %25 = tpu.matmul %0, %1, %cst_13 {dimension_numbers = #tpu.dot_dimension_numbers<[1], [0], [0], [1], [0, 0, 1, 1], [], []>} : vector<8x16xf32>, vector<16x32xf32>, vector<8x32xf32> -> vector<8x32xf32>
    %26 = arith.addf %25, %16 : vector<8x32xf32>
    %27 = math.tanh %26 : vector<8x32xf32>
    %cst_14 = arith.constant dense<0.000000e+00> : vector<8x16xf32>
    %28 = tpu.matmul %27, %2, %cst_14 {dimension_numbers = #tpu.dot_dimension_numbers<[1], [0], [0], [1], [0, 0, 1, 1], [], []>} : vector<8x32xf32>, vector<32x16xf32>, vector<8x16xf32> -> vector<8x16xf32>
    %29 = arith.addf %28, %11 : vector<8x16xf32>
    %30 = vector.broadcast %cst_11 : f32 to vector<8x16xf32>
    %31 = arith.mulf %30, %29 : vector<8x16xf32>
    %32 = arith.addf %0, %31 : vector<8x16xf32>
    %cst_15 = arith.constant dense<0.000000e+00> : vector<8x32xf32>
    %33 = tpu.matmul %32, %1, %cst_15 {dimension_numbers = #tpu.dot_dimension_numbers<[1], [0], [0], [1], [0, 0, 1, 1], [], []>} : vector<8x16xf32>, vector<16x32xf32>, vector<8x32xf32> -> vector<8x32xf32>
    %34 = arith.addf %33, %20 : vector<8x32xf32>
    %35 = math.tanh %34 : vector<8x32xf32>
    %cst_16 = arith.constant dense<0.000000e+00> : vector<8x16xf32>
    %36 = tpu.matmul %35, %2, %cst_16 {dimension_numbers = #tpu.dot_dimension_numbers<[1], [0], [0], [1], [0, 0, 1, 1], [], []>} : vector<8x32xf32>, vector<32x16xf32>, vector<8x16xf32> -> vector<8x16xf32>
    %37 = arith.addf %36, %11 : vector<8x16xf32>
    %38 = vector.broadcast %cst_11 : f32 to vector<8x16xf32>
    %39 = arith.mulf %38, %37 : vector<8x16xf32>
    %40 = arith.addf %0, %39 : vector<8x16xf32>
    %cst_17 = arith.constant dense<0.000000e+00> : vector<8x32xf32>
    %41 = tpu.matmul %40, %1, %cst_17 {dimension_numbers = #tpu.dot_dimension_numbers<[1], [0], [0], [1], [0, 0, 1, 1], [], []>} : vector<8x16xf32>, vector<16x32xf32>, vector<8x32xf32> -> vector<8x32xf32>
    %42 = arith.addf %41, %20 : vector<8x32xf32>
    %43 = math.tanh %42 : vector<8x32xf32>
    %cst_18 = arith.constant dense<0.000000e+00> : vector<8x16xf32>
    %44 = tpu.matmul %43, %2, %cst_18 {dimension_numbers = #tpu.dot_dimension_numbers<[1], [0], [0], [1], [0, 0, 1, 1], [], []>} : vector<8x32xf32>, vector<32x16xf32>, vector<8x16xf32> -> vector<8x16xf32>
    %45 = arith.addf %44, %11 : vector<8x16xf32>
    %46 = vector.broadcast %cst : f32 to vector<8x16xf32>
    %47 = arith.mulf %46, %45 : vector<8x16xf32>
    %48 = arith.addf %0, %47 : vector<8x16xf32>
    %cst_19 = arith.constant dense<0.000000e+00> : vector<8x32xf32>
    %49 = tpu.matmul %48, %1, %cst_19 {dimension_numbers = #tpu.dot_dimension_numbers<[1], [0], [0], [1], [0, 0, 1, 1], [], []>} : vector<8x16xf32>, vector<16x32xf32>, vector<8x32xf32> -> vector<8x32xf32>
    %50 = arith.addf %49, %24 : vector<8x32xf32>
    %51 = math.tanh %50 : vector<8x32xf32>
    %cst_20 = arith.constant dense<0.000000e+00> : vector<8x16xf32>
    %52 = tpu.matmul %51, %2, %cst_20 {dimension_numbers = #tpu.dot_dimension_numbers<[1], [0], [0], [1], [0, 0, 1, 1], [], []>} : vector<8x32xf32>, vector<32x16xf32>, vector<8x16xf32> -> vector<8x16xf32>
    %53 = arith.addf %52, %11 : vector<8x16xf32>
    %54 = arith.addf %37, %45 : vector<8x16xf32>
    %cst_21 = arith.constant 2.000000e+00 : f32
    %55 = vector.broadcast %cst_21 : f32 to vector<8x16xf32>
    %56 = arith.mulf %55, %54 : vector<8x16xf32>
    %57 = arith.addf %29, %56 : vector<8x16xf32>
    %58 = arith.addf %57, %53 : vector<8x16xf32>
    %59 = vector.broadcast %cst_12 : f32 to vector<8x16xf32>
    %60 = arith.mulf %59, %58 : vector<8x16xf32>
    %61 = arith.addf %0, %60 : vector<8x16xf32>
    %c1_i32 = arith.constant 1 : i32
    %62 = arith.sitofp %c1_i32 : i32 to f32
    %63 = arith.mulf %62, %cst : f32
    %64 = vector.broadcast %63 : f32 to vector<8x32xf32>
    %65 = arith.mulf %64, %5 : vector<8x32xf32>
    %66 = arith.addf %65, %8 : vector<8x32xf32>
    %67 = arith.addf %63, %cst_11 : f32
    %68 = vector.broadcast %67 : f32 to vector<8x32xf32>
    %69 = arith.mulf %68, %5 : vector<8x32xf32>
    %70 = arith.addf %69, %8 : vector<8x32xf32>
    %71 = arith.addf %63, %cst : f32
    %72 = vector.broadcast %71 : f32 to vector<8x32xf32>
    %73 = arith.mulf %72, %5 : vector<8x32xf32>
    %74 = arith.addf %73, %8 : vector<8x32xf32>
    %cst_22 = arith.constant dense<0.000000e+00> : vector<8x32xf32>
    %75 = tpu.matmul %61, %1, %cst_22 {dimension_numbers = #tpu.dot_dimension_numbers<[1], [0], [0], [1], [0, 0, 1, 1], [], []>} : vector<8x16xf32>, vector<16x32xf32>, vector<8x32xf32> -> vector<8x32xf32>
    %76 = arith.addf %75, %66 : vector<8x32xf32>
    %77 = math.tanh %76 : vector<8x32xf32>
    %cst_23 = arith.constant dense<0.000000e+00> : vector<8x16xf32>
    %78 = tpu.matmul %77, %2, %cst_23 {dimension_numbers = #tpu.dot_dimension_numbers<[1], [0], [0], [1], [0, 0, 1, 1], [], []>} : vector<8x32xf32>, vector<32x16xf32>, vector<8x16xf32> -> vector<8x16xf32>
    %79 = arith.addf %78, %11 : vector<8x16xf32>
    %80 = vector.broadcast %cst_11 : f32 to vector<8x16xf32>
    %81 = arith.mulf %80, %79 : vector<8x16xf32>
    %82 = arith.addf %61, %81 : vector<8x16xf32>
    %cst_24 = arith.constant dense<0.000000e+00> : vector<8x32xf32>
    %83 = tpu.matmul %82, %1, %cst_24 {dimension_numbers = #tpu.dot_dimension_numbers<[1], [0], [0], [1], [0, 0, 1, 1], [], []>} : vector<8x16xf32>, vector<16x32xf32>, vector<8x32xf32> -> vector<8x32xf32>
    %84 = arith.addf %83, %70 : vector<8x32xf32>
    %85 = math.tanh %84 : vector<8x32xf32>
    %cst_25 = arith.constant dense<0.000000e+00> : vector<8x16xf32>
    %86 = tpu.matmul %85, %2, %cst_25 {dimension_numbers = #tpu.dot_dimension_numbers<[1], [0], [0], [1], [0, 0, 1, 1], [], []>} : vector<8x32xf32>, vector<32x16xf32>, vector<8x16xf32> -> vector<8x16xf32>
    %87 = arith.addf %86, %11 : vector<8x16xf32>
    %88 = vector.broadcast %cst_11 : f32 to vector<8x16xf32>
    %89 = arith.mulf %88, %87 : vector<8x16xf32>
    %90 = arith.addf %61, %89 : vector<8x16xf32>
    %cst_26 = arith.constant dense<0.000000e+00> : vector<8x32xf32>
    %91 = tpu.matmul %90, %1, %cst_26 {dimension_numbers = #tpu.dot_dimension_numbers<[1], [0], [0], [1], [0, 0, 1, 1], [], []>} : vector<8x16xf32>, vector<16x32xf32>, vector<8x32xf32> -> vector<8x32xf32>
    %92 = arith.addf %91, %70 : vector<8x32xf32>
    %93 = math.tanh %92 : vector<8x32xf32>
    %cst_27 = arith.constant dense<0.000000e+00> : vector<8x16xf32>
    %94 = tpu.matmul %93, %2, %cst_27 {dimension_numbers = #tpu.dot_dimension_numbers<[1], [0], [0], [1], [0, 0, 1, 1], [], []>} : vector<8x32xf32>, vector<32x16xf32>, vector<8x16xf32> -> vector<8x16xf32>
    %95 = arith.addf %94, %11 : vector<8x16xf32>
    %96 = vector.broadcast %cst : f32 to vector<8x16xf32>
    %97 = arith.mulf %96, %95 : vector<8x16xf32>
    %98 = arith.addf %61, %97 : vector<8x16xf32>
    %cst_28 = arith.constant dense<0.000000e+00> : vector<8x32xf32>
    %99 = tpu.matmul %98, %1, %cst_28 {dimension_numbers = #tpu.dot_dimension_numbers<[1], [0], [0], [1], [0, 0, 1, 1], [], []>} : vector<8x16xf32>, vector<16x32xf32>, vector<8x32xf32> -> vector<8x32xf32>
    %100 = arith.addf %99, %74 : vector<8x32xf32>
    %101 = math.tanh %100 : vector<8x32xf32>
    %cst_29 = arith.constant dense<0.000000e+00> : vector<8x16xf32>
    %102 = tpu.matmul %101, %2, %cst_29 {dimension_numbers = #tpu.dot_dimension_numbers<[1], [0], [0], [1], [0, 0, 1, 1], [], []>} : vector<8x32xf32>, vector<32x16xf32>, vector<8x16xf32> -> vector<8x16xf32>
    %103 = arith.addf %102, %11 : vector<8x16xf32>
    %104 = arith.addf %87, %95 : vector<8x16xf32>
    %cst_30 = arith.constant 2.000000e+00 : f32
    %105 = vector.broadcast %cst_30 : f32 to vector<8x16xf32>
    %106 = arith.mulf %105, %104 : vector<8x16xf32>
    %107 = arith.addf %79, %106 : vector<8x16xf32>
    %108 = arith.addf %107, %103 : vector<8x16xf32>
    %109 = vector.broadcast %cst_12 : f32 to vector<8x16xf32>
    %110 = arith.mulf %109, %108 : vector<8x16xf32>
    %111 = arith.addf %61, %110 : vector<8x16xf32>
    %c2_i32 = arith.constant 2 : i32
    %112 = arith.sitofp %c2_i32 : i32 to f32
    %113 = arith.mulf %112, %cst : f32
    %114 = vector.broadcast %113 : f32 to vector<8x32xf32>
    %115 = arith.mulf %114, %5 : vector<8x32xf32>
    %116 = arith.addf %115, %8 : vector<8x32xf32>
    %117 = arith.addf %113, %cst_11 : f32
    %118 = vector.broadcast %117 : f32 to vector<8x32xf32>
    %119 = arith.mulf %118, %5 : vector<8x32xf32>
    %120 = arith.addf %119, %8 : vector<8x32xf32>
    %121 = arith.addf %113, %cst : f32
    %122 = vector.broadcast %121 : f32 to vector<8x32xf32>
    %123 = arith.mulf %122, %5 : vector<8x32xf32>
    %124 = arith.addf %123, %8 : vector<8x32xf32>
    %cst_31 = arith.constant dense<0.000000e+00> : vector<8x32xf32>
    %125 = tpu.matmul %111, %1, %cst_31 {dimension_numbers = #tpu.dot_dimension_numbers<[1], [0], [0], [1], [0, 0, 1, 1], [], []>} : vector<8x16xf32>, vector<16x32xf32>, vector<8x32xf32> -> vector<8x32xf32>
    %126 = arith.addf %125, %116 : vector<8x32xf32>
    %127 = math.tanh %126 : vector<8x32xf32>
    %cst_32 = arith.constant dense<0.000000e+00> : vector<8x16xf32>
    %128 = tpu.matmul %127, %2, %cst_32 {dimension_numbers = #tpu.dot_dimension_numbers<[1], [0], [0], [1], [0, 0, 1, 1], [], []>} : vector<8x32xf32>, vector<32x16xf32>, vector<8x16xf32> -> vector<8x16xf32>
    %129 = arith.addf %128, %11 : vector<8x16xf32>
    %130 = vector.broadcast %cst_11 : f32 to vector<8x16xf32>
    %131 = arith.mulf %130, %129 : vector<8x16xf32>
    %132 = arith.addf %111, %131 : vector<8x16xf32>
    %cst_33 = arith.constant dense<0.000000e+00> : vector<8x32xf32>
    %133 = tpu.matmul %132, %1, %cst_33 {dimension_numbers = #tpu.dot_dimension_numbers<[1], [0], [0], [1], [0, 0, 1, 1], [], []>} : vector<8x16xf32>, vector<16x32xf32>, vector<8x32xf32> -> vector<8x32xf32>
    %134 = arith.addf %133, %120 : vector<8x32xf32>
    %135 = math.tanh %134 : vector<8x32xf32>
    %cst_34 = arith.constant dense<0.000000e+00> : vector<8x16xf32>
    %136 = tpu.matmul %135, %2, %cst_34 {dimension_numbers = #tpu.dot_dimension_numbers<[1], [0], [0], [1], [0, 0, 1, 1], [], []>} : vector<8x32xf32>, vector<32x16xf32>, vector<8x16xf32> -> vector<8x16xf32>
    %137 = arith.addf %136, %11 : vector<8x16xf32>
    %138 = vector.broadcast %cst_11 : f32 to vector<8x16xf32>
    %139 = arith.mulf %138, %137 : vector<8x16xf32>
    %140 = arith.addf %111, %139 : vector<8x16xf32>
    %cst_35 = arith.constant dense<0.000000e+00> : vector<8x32xf32>
    %141 = tpu.matmul %140, %1, %cst_35 {dimension_numbers = #tpu.dot_dimension_numbers<[1], [0], [0], [1], [0, 0, 1, 1], [], []>} : vector<8x16xf32>, vector<16x32xf32>, vector<8x32xf32> -> vector<8x32xf32>
    %142 = arith.addf %141, %120 : vector<8x32xf32>
    %143 = math.tanh %142 : vector<8x32xf32>
    %cst_36 = arith.constant dense<0.000000e+00> : vector<8x16xf32>
    %144 = tpu.matmul %143, %2, %cst_36 {dimension_numbers = #tpu.dot_dimension_numbers<[1], [0], [0], [1], [0, 0, 1, 1], [], []>} : vector<8x32xf32>, vector<32x16xf32>, vector<8x16xf32> -> vector<8x16xf32>
    %145 = arith.addf %144, %11 : vector<8x16xf32>
    %146 = vector.broadcast %cst : f32 to vector<8x16xf32>
    %147 = arith.mulf %146, %145 : vector<8x16xf32>
    %148 = arith.addf %111, %147 : vector<8x16xf32>
    %cst_37 = arith.constant dense<0.000000e+00> : vector<8x32xf32>
    %149 = tpu.matmul %148, %1, %cst_37 {dimension_numbers = #tpu.dot_dimension_numbers<[1], [0], [0], [1], [0, 0, 1, 1], [], []>} : vector<8x16xf32>, vector<16x32xf32>, vector<8x32xf32> -> vector<8x32xf32>
    %150 = arith.addf %149, %124 : vector<8x32xf32>
    %151 = math.tanh %150 : vector<8x32xf32>
    %cst_38 = arith.constant dense<0.000000e+00> : vector<8x16xf32>
    %152 = tpu.matmul %151, %2, %cst_38 {dimension_numbers = #tpu.dot_dimension_numbers<[1], [0], [0], [1], [0, 0, 1, 1], [], []>} : vector<8x32xf32>, vector<32x16xf32>, vector<8x16xf32> -> vector<8x16xf32>
    %153 = arith.addf %152, %11 : vector<8x16xf32>
    %154 = arith.addf %137, %145 : vector<8x16xf32>
    %cst_39 = arith.constant 2.000000e+00 : f32
    %155 = vector.broadcast %cst_39 : f32 to vector<8x16xf32>
    %156 = arith.mulf %155, %154 : vector<8x16xf32>
    %157 = arith.addf %129, %156 : vector<8x16xf32>
    %158 = arith.addf %157, %153 : vector<8x16xf32>
    %159 = vector.broadcast %cst_12 : f32 to vector<8x16xf32>
    %160 = arith.mulf %159, %158 : vector<8x16xf32>
    %161 = arith.addf %111, %160 : vector<8x16xf32>
    %c3_i32 = arith.constant 3 : i32
    %162 = arith.sitofp %c3_i32 : i32 to f32
    %163 = arith.mulf %162, %cst : f32
    %164 = vector.broadcast %163 : f32 to vector<8x32xf32>
    %165 = arith.mulf %164, %5 : vector<8x32xf32>
    %166 = arith.addf %165, %8 : vector<8x32xf32>
    %167 = arith.addf %163, %cst_11 : f32
    %168 = vector.broadcast %167 : f32 to vector<8x32xf32>
    %169 = arith.mulf %168, %5 : vector<8x32xf32>
    %170 = arith.addf %169, %8 : vector<8x32xf32>
    %171 = arith.addf %163, %cst : f32
    %172 = vector.broadcast %171 : f32 to vector<8x32xf32>
    %173 = arith.mulf %172, %5 : vector<8x32xf32>
    %174 = arith.addf %173, %8 : vector<8x32xf32>
    %cst_40 = arith.constant dense<0.000000e+00> : vector<8x32xf32>
    %175 = tpu.matmul %161, %1, %cst_40 {dimension_numbers = #tpu.dot_dimension_numbers<[1], [0], [0], [1], [0, 0, 1, 1], [], []>} : vector<8x16xf32>, vector<16x32xf32>, vector<8x32xf32> -> vector<8x32xf32>
    %176 = arith.addf %175, %166 : vector<8x32xf32>
    %177 = math.tanh %176 : vector<8x32xf32>
    %cst_41 = arith.constant dense<0.000000e+00> : vector<8x16xf32>
    %178 = tpu.matmul %177, %2, %cst_41 {dimension_numbers = #tpu.dot_dimension_numbers<[1], [0], [0], [1], [0, 0, 1, 1], [], []>} : vector<8x32xf32>, vector<32x16xf32>, vector<8x16xf32> -> vector<8x16xf32>
    %179 = arith.addf %178, %11 : vector<8x16xf32>
    %180 = vector.broadcast %cst_11 : f32 to vector<8x16xf32>
    %181 = arith.mulf %180, %179 : vector<8x16xf32>
    %182 = arith.addf %161, %181 : vector<8x16xf32>
    %cst_42 = arith.constant dense<0.000000e+00> : vector<8x32xf32>
    %183 = tpu.matmul %182, %1, %cst_42 {dimension_numbers = #tpu.dot_dimension_numbers<[1], [0], [0], [1], [0, 0, 1, 1], [], []>} : vector<8x16xf32>, vector<16x32xf32>, vector<8x32xf32> -> vector<8x32xf32>
    %184 = arith.addf %183, %170 : vector<8x32xf32>
    %185 = math.tanh %184 : vector<8x32xf32>
    %cst_43 = arith.constant dense<0.000000e+00> : vector<8x16xf32>
    %186 = tpu.matmul %185, %2, %cst_43 {dimension_numbers = #tpu.dot_dimension_numbers<[1], [0], [0], [1], [0, 0, 1, 1], [], []>} : vector<8x32xf32>, vector<32x16xf32>, vector<8x16xf32> -> vector<8x16xf32>
    %187 = arith.addf %186, %11 : vector<8x16xf32>
    %188 = vector.broadcast %cst_11 : f32 to vector<8x16xf32>
    %189 = arith.mulf %188, %187 : vector<8x16xf32>
    %190 = arith.addf %161, %189 : vector<8x16xf32>
    %cst_44 = arith.constant dense<0.000000e+00> : vector<8x32xf32>
    %191 = tpu.matmul %190, %1, %cst_44 {dimension_numbers = #tpu.dot_dimension_numbers<[1], [0], [0], [1], [0, 0, 1, 1], [], []>} : vector<8x16xf32>, vector<16x32xf32>, vector<8x32xf32> -> vector<8x32xf32>
    %192 = arith.addf %191, %170 : vector<8x32xf32>
    %193 = math.tanh %192 : vector<8x32xf32>
    %cst_45 = arith.constant dense<0.000000e+00> : vector<8x16xf32>
    %194 = tpu.matmul %193, %2, %cst_45 {dimension_numbers = #tpu.dot_dimension_numbers<[1], [0], [0], [1], [0, 0, 1, 1], [], []>} : vector<8x32xf32>, vector<32x16xf32>, vector<8x16xf32> -> vector<8x16xf32>
    %195 = arith.addf %194, %11 : vector<8x16xf32>
    %196 = vector.broadcast %cst : f32 to vector<8x16xf32>
    %197 = arith.mulf %196, %195 : vector<8x16xf32>
    %198 = arith.addf %161, %197 : vector<8x16xf32>
    %cst_46 = arith.constant dense<0.000000e+00> : vector<8x32xf32>
    %199 = tpu.matmul %198, %1, %cst_46 {dimension_numbers = #tpu.dot_dimension_numbers<[1], [0], [0], [1], [0, 0, 1, 1], [], []>} : vector<8x16xf32>, vector<16x32xf32>, vector<8x32xf32> -> vector<8x32xf32>
    %200 = arith.addf %199, %174 : vector<8x32xf32>
    %201 = math.tanh %200 : vector<8x32xf32>
    %cst_47 = arith.constant dense<0.000000e+00> : vector<8x16xf32>
    %202 = tpu.matmul %201, %2, %cst_47 {dimension_numbers = #tpu.dot_dimension_numbers<[1], [0], [0], [1], [0, 0, 1, 1], [], []>} : vector<8x32xf32>, vector<32x16xf32>, vector<8x16xf32> -> vector<8x16xf32>
    %203 = arith.addf %202, %11 : vector<8x16xf32>
    %204 = arith.addf %187, %195 : vector<8x16xf32>
    %cst_48 = arith.constant 2.000000e+00 : f32
    %205 = vector.broadcast %cst_48 : f32 to vector<8x16xf32>
    %206 = arith.mulf %205, %204 : vector<8x16xf32>
    %207 = arith.addf %179, %206 : vector<8x16xf32>
    %208 = arith.addf %207, %203 : vector<8x16xf32>
    %209 = vector.broadcast %cst_12 : f32 to vector<8x16xf32>
    %210 = arith.mulf %209, %208 : vector<8x16xf32>
    %211 = arith.addf %161, %210 : vector<8x16xf32>
    %c4_i32 = arith.constant 4 : i32
    %212 = arith.sitofp %c4_i32 : i32 to f32
    %213 = arith.mulf %212, %cst : f32
    %214 = vector.broadcast %213 : f32 to vector<8x32xf32>
    %215 = arith.mulf %214, %5 : vector<8x32xf32>
    %216 = arith.addf %215, %8 : vector<8x32xf32>
    %217 = arith.addf %213, %cst_11 : f32
    %218 = vector.broadcast %217 : f32 to vector<8x32xf32>
    %219 = arith.mulf %218, %5 : vector<8x32xf32>
    %220 = arith.addf %219, %8 : vector<8x32xf32>
    %221 = arith.addf %213, %cst : f32
    %222 = vector.broadcast %221 : f32 to vector<8x32xf32>
    %223 = arith.mulf %222, %5 : vector<8x32xf32>
    %224 = arith.addf %223, %8 : vector<8x32xf32>
    %cst_49 = arith.constant dense<0.000000e+00> : vector<8x32xf32>
    %225 = tpu.matmul %211, %1, %cst_49 {dimension_numbers = #tpu.dot_dimension_numbers<[1], [0], [0], [1], [0, 0, 1, 1], [], []>} : vector<8x16xf32>, vector<16x32xf32>, vector<8x32xf32> -> vector<8x32xf32>
    %226 = arith.addf %225, %216 : vector<8x32xf32>
    %227 = math.tanh %226 : vector<8x32xf32>
    %cst_50 = arith.constant dense<0.000000e+00> : vector<8x16xf32>
    %228 = tpu.matmul %227, %2, %cst_50 {dimension_numbers = #tpu.dot_dimension_numbers<[1], [0], [0], [1], [0, 0, 1, 1], [], []>} : vector<8x32xf32>, vector<32x16xf32>, vector<8x16xf32> -> vector<8x16xf32>
    %229 = arith.addf %228, %11 : vector<8x16xf32>
    %230 = vector.broadcast %cst_11 : f32 to vector<8x16xf32>
    %231 = arith.mulf %230, %229 : vector<8x16xf32>
    %232 = arith.addf %211, %231 : vector<8x16xf32>
    %cst_51 = arith.constant dense<0.000000e+00> : vector<8x32xf32>
    %233 = tpu.matmul %232, %1, %cst_51 {dimension_numbers = #tpu.dot_dimension_numbers<[1], [0], [0], [1], [0, 0, 1, 1], [], []>} : vector<8x16xf32>, vector<16x32xf32>, vector<8x32xf32> -> vector<8x32xf32>
    %234 = arith.addf %233, %220 : vector<8x32xf32>
    %235 = math.tanh %234 : vector<8x32xf32>
    %cst_52 = arith.constant dense<0.000000e+00> : vector<8x16xf32>
    %236 = tpu.matmul %235, %2, %cst_52 {dimension_numbers = #tpu.dot_dimension_numbers<[1], [0], [0], [1], [0, 0, 1, 1], [], []>} : vector<8x32xf32>, vector<32x16xf32>, vector<8x16xf32> -> vector<8x16xf32>
    %237 = arith.addf %236, %11 : vector<8x16xf32>
    %238 = vector.broadcast %cst_11 : f32 to vector<8x16xf32>
    %239 = arith.mulf %238, %237 : vector<8x16xf32>
    %240 = arith.addf %211, %239 : vector<8x16xf32>
    %cst_53 = arith.constant dense<0.000000e+00> : vector<8x32xf32>
    %241 = tpu.matmul %240, %1, %cst_53 {dimension_numbers = #tpu.dot_dimension_numbers<[1], [0], [0], [1], [0, 0, 1, 1], [], []>} : vector<8x16xf32>, vector<16x32xf32>, vector<8x32xf32> -> vector<8x32xf32>
    %242 = arith.addf %241, %220 : vector<8x32xf32>
    %243 = math.tanh %242 : vector<8x32xf32>
    %cst_54 = arith.constant dense<0.000000e+00> : vector<8x16xf32>
    %244 = tpu.matmul %243, %2, %cst_54 {dimension_numbers = #tpu.dot_dimension_numbers<[1], [0], [0], [1], [0, 0, 1, 1], [], []>} : vector<8x32xf32>, vector<32x16xf32>, vector<8x16xf32> -> vector<8x16xf32>
    %245 = arith.addf %244, %11 : vector<8x16xf32>
    %246 = vector.broadcast %cst : f32 to vector<8x16xf32>
    %247 = arith.mulf %246, %245 : vector<8x16xf32>
    %248 = arith.addf %211, %247 : vector<8x16xf32>
    %cst_55 = arith.constant dense<0.000000e+00> : vector<8x32xf32>
    %249 = tpu.matmul %248, %1, %cst_55 {dimension_numbers = #tpu.dot_dimension_numbers<[1], [0], [0], [1], [0, 0, 1, 1], [], []>} : vector<8x16xf32>, vector<16x32xf32>, vector<8x32xf32> -> vector<8x32xf32>
    %250 = arith.addf %249, %224 : vector<8x32xf32>
    %251 = math.tanh %250 : vector<8x32xf32>
    %cst_56 = arith.constant dense<0.000000e+00> : vector<8x16xf32>
    %252 = tpu.matmul %251, %2, %cst_56 {dimension_numbers = #tpu.dot_dimension_numbers<[1], [0], [0], [1], [0, 0, 1, 1], [], []>} : vector<8x32xf32>, vector<32x16xf32>, vector<8x16xf32> -> vector<8x16xf32>
    %253 = arith.addf %252, %11 : vector<8x16xf32>
    %254 = arith.addf %237, %245 : vector<8x16xf32>
    %cst_57 = arith.constant 2.000000e+00 : f32
    %255 = vector.broadcast %cst_57 : f32 to vector<8x16xf32>
    %256 = arith.mulf %255, %254 : vector<8x16xf32>
    %257 = arith.addf %229, %256 : vector<8x16xf32>
    %258 = arith.addf %257, %253 : vector<8x16xf32>
    %259 = vector.broadcast %cst_12 : f32 to vector<8x16xf32>
    %260 = arith.mulf %259, %258 : vector<8x16xf32>
    %261 = arith.addf %211, %260 : vector<8x16xf32>
    %c5_i32 = arith.constant 5 : i32
    %262 = arith.sitofp %c5_i32 : i32 to f32
    %263 = arith.mulf %262, %cst : f32
    %264 = vector.broadcast %263 : f32 to vector<8x32xf32>
    %265 = arith.mulf %264, %5 : vector<8x32xf32>
    %266 = arith.addf %265, %8 : vector<8x32xf32>
    %267 = arith.addf %263, %cst_11 : f32
    %268 = vector.broadcast %267 : f32 to vector<8x32xf32>
    %269 = arith.mulf %268, %5 : vector<8x32xf32>
    %270 = arith.addf %269, %8 : vector<8x32xf32>
    %271 = arith.addf %263, %cst : f32
    %272 = vector.broadcast %271 : f32 to vector<8x32xf32>
    %273 = arith.mulf %272, %5 : vector<8x32xf32>
    %274 = arith.addf %273, %8 : vector<8x32xf32>
    %cst_58 = arith.constant dense<0.000000e+00> : vector<8x32xf32>
    %275 = tpu.matmul %261, %1, %cst_58 {dimension_numbers = #tpu.dot_dimension_numbers<[1], [0], [0], [1], [0, 0, 1, 1], [], []>} : vector<8x16xf32>, vector<16x32xf32>, vector<8x32xf32> -> vector<8x32xf32>
    %276 = arith.addf %275, %266 : vector<8x32xf32>
    %277 = math.tanh %276 : vector<8x32xf32>
    %cst_59 = arith.constant dense<0.000000e+00> : vector<8x16xf32>
    %278 = tpu.matmul %277, %2, %cst_59 {dimension_numbers = #tpu.dot_dimension_numbers<[1], [0], [0], [1], [0, 0, 1, 1], [], []>} : vector<8x32xf32>, vector<32x16xf32>, vector<8x16xf32> -> vector<8x16xf32>
    %279 = arith.addf %278, %11 : vector<8x16xf32>
    %280 = vector.broadcast %cst_11 : f32 to vector<8x16xf32>
    %281 = arith.mulf %280, %279 : vector<8x16xf32>
    %282 = arith.addf %261, %281 : vector<8x16xf32>
    %cst_60 = arith.constant dense<0.000000e+00> : vector<8x32xf32>
    %283 = tpu.matmul %282, %1, %cst_60 {dimension_numbers = #tpu.dot_dimension_numbers<[1], [0], [0], [1], [0, 0, 1, 1], [], []>} : vector<8x16xf32>, vector<16x32xf32>, vector<8x32xf32> -> vector<8x32xf32>
    %284 = arith.addf %283, %270 : vector<8x32xf32>
    %285 = math.tanh %284 : vector<8x32xf32>
    %cst_61 = arith.constant dense<0.000000e+00> : vector<8x16xf32>
    %286 = tpu.matmul %285, %2, %cst_61 {dimension_numbers = #tpu.dot_dimension_numbers<[1], [0], [0], [1], [0, 0, 1, 1], [], []>} : vector<8x32xf32>, vector<32x16xf32>, vector<8x16xf32> -> vector<8x16xf32>
    %287 = arith.addf %286, %11 : vector<8x16xf32>
    %288 = vector.broadcast %cst_11 : f32 to vector<8x16xf32>
    %289 = arith.mulf %288, %287 : vector<8x16xf32>
    %290 = arith.addf %261, %289 : vector<8x16xf32>
    %cst_62 = arith.constant dense<0.000000e+00> : vector<8x32xf32>
    %291 = tpu.matmul %290, %1, %cst_62 {dimension_numbers = #tpu.dot_dimension_numbers<[1], [0], [0], [1], [0, 0, 1, 1], [], []>} : vector<8x16xf32>, vector<16x32xf32>, vector<8x32xf32> -> vector<8x32xf32>
    %292 = arith.addf %291, %270 : vector<8x32xf32>
    %293 = math.tanh %292 : vector<8x32xf32>
    %cst_63 = arith.constant dense<0.000000e+00> : vector<8x16xf32>
    %294 = tpu.matmul %293, %2, %cst_63 {dimension_numbers = #tpu.dot_dimension_numbers<[1], [0], [0], [1], [0, 0, 1, 1], [], []>} : vector<8x32xf32>, vector<32x16xf32>, vector<8x16xf32> -> vector<8x16xf32>
    %295 = arith.addf %294, %11 : vector<8x16xf32>
    %296 = vector.broadcast %cst : f32 to vector<8x16xf32>
    %297 = arith.mulf %296, %295 : vector<8x16xf32>
    %298 = arith.addf %261, %297 : vector<8x16xf32>
    %cst_64 = arith.constant dense<0.000000e+00> : vector<8x32xf32>
    %299 = tpu.matmul %298, %1, %cst_64 {dimension_numbers = #tpu.dot_dimension_numbers<[1], [0], [0], [1], [0, 0, 1, 1], [], []>} : vector<8x16xf32>, vector<16x32xf32>, vector<8x32xf32> -> vector<8x32xf32>
    %300 = arith.addf %299, %274 : vector<8x32xf32>
    %301 = math.tanh %300 : vector<8x32xf32>
    %cst_65 = arith.constant dense<0.000000e+00> : vector<8x16xf32>
    %302 = tpu.matmul %301, %2, %cst_65 {dimension_numbers = #tpu.dot_dimension_numbers<[1], [0], [0], [1], [0, 0, 1, 1], [], []>} : vector<8x32xf32>, vector<32x16xf32>, vector<8x16xf32> -> vector<8x16xf32>
    %303 = arith.addf %302, %11 : vector<8x16xf32>
    %304 = arith.addf %287, %295 : vector<8x16xf32>
    %cst_66 = arith.constant 2.000000e+00 : f32
    %305 = vector.broadcast %cst_66 : f32 to vector<8x16xf32>
    %306 = arith.mulf %305, %304 : vector<8x16xf32>
    %307 = arith.addf %279, %306 : vector<8x16xf32>
    %308 = arith.addf %307, %303 : vector<8x16xf32>
    %309 = vector.broadcast %cst_12 : f32 to vector<8x16xf32>
    %310 = arith.mulf %309, %308 : vector<8x16xf32>
    %311 = arith.addf %261, %310 : vector<8x16xf32>
    %c6_i32 = arith.constant 6 : i32
    %312 = arith.sitofp %c6_i32 : i32 to f32
    %313 = arith.mulf %312, %cst : f32
    %314 = vector.broadcast %313 : f32 to vector<8x32xf32>
    %315 = arith.mulf %314, %5 : vector<8x32xf32>
    %316 = arith.addf %315, %8 : vector<8x32xf32>
    %317 = arith.addf %313, %cst_11 : f32
    %318 = vector.broadcast %317 : f32 to vector<8x32xf32>
    %319 = arith.mulf %318, %5 : vector<8x32xf32>
    %320 = arith.addf %319, %8 : vector<8x32xf32>
    %321 = arith.addf %313, %cst : f32
    %322 = vector.broadcast %321 : f32 to vector<8x32xf32>
    %323 = arith.mulf %322, %5 : vector<8x32xf32>
    %324 = arith.addf %323, %8 : vector<8x32xf32>
    %cst_67 = arith.constant dense<0.000000e+00> : vector<8x32xf32>
    %325 = tpu.matmul %311, %1, %cst_67 {dimension_numbers = #tpu.dot_dimension_numbers<[1], [0], [0], [1], [0, 0, 1, 1], [], []>} : vector<8x16xf32>, vector<16x32xf32>, vector<8x32xf32> -> vector<8x32xf32>
    %326 = arith.addf %325, %316 : vector<8x32xf32>
    %327 = math.tanh %326 : vector<8x32xf32>
    %cst_68 = arith.constant dense<0.000000e+00> : vector<8x16xf32>
    %328 = tpu.matmul %327, %2, %cst_68 {dimension_numbers = #tpu.dot_dimension_numbers<[1], [0], [0], [1], [0, 0, 1, 1], [], []>} : vector<8x32xf32>, vector<32x16xf32>, vector<8x16xf32> -> vector<8x16xf32>
    %329 = arith.addf %328, %11 : vector<8x16xf32>
    %330 = vector.broadcast %cst_11 : f32 to vector<8x16xf32>
    %331 = arith.mulf %330, %329 : vector<8x16xf32>
    %332 = arith.addf %311, %331 : vector<8x16xf32>
    %cst_69 = arith.constant dense<0.000000e+00> : vector<8x32xf32>
    %333 = tpu.matmul %332, %1, %cst_69 {dimension_numbers = #tpu.dot_dimension_numbers<[1], [0], [0], [1], [0, 0, 1, 1], [], []>} : vector<8x16xf32>, vector<16x32xf32>, vector<8x32xf32> -> vector<8x32xf32>
    %334 = arith.addf %333, %320 : vector<8x32xf32>
    %335 = math.tanh %334 : vector<8x32xf32>
    %cst_70 = arith.constant dense<0.000000e+00> : vector<8x16xf32>
    %336 = tpu.matmul %335, %2, %cst_70 {dimension_numbers = #tpu.dot_dimension_numbers<[1], [0], [0], [1], [0, 0, 1, 1], [], []>} : vector<8x32xf32>, vector<32x16xf32>, vector<8x16xf32> -> vector<8x16xf32>
    %337 = arith.addf %336, %11 : vector<8x16xf32>
    %338 = vector.broadcast %cst_11 : f32 to vector<8x16xf32>
    %339 = arith.mulf %338, %337 : vector<8x16xf32>
    %340 = arith.addf %311, %339 : vector<8x16xf32>
    %cst_71 = arith.constant dense<0.000000e+00> : vector<8x32xf32>
    %341 = tpu.matmul %340, %1, %cst_71 {dimension_numbers = #tpu.dot_dimension_numbers<[1], [0], [0], [1], [0, 0, 1, 1], [], []>} : vector<8x16xf32>, vector<16x32xf32>, vector<8x32xf32> -> vector<8x32xf32>
    %342 = arith.addf %341, %320 : vector<8x32xf32>
    %343 = math.tanh %342 : vector<8x32xf32>
    %cst_72 = arith.constant dense<0.000000e+00> : vector<8x16xf32>
    %344 = tpu.matmul %343, %2, %cst_72 {dimension_numbers = #tpu.dot_dimension_numbers<[1], [0], [0], [1], [0, 0, 1, 1], [], []>} : vector<8x32xf32>, vector<32x16xf32>, vector<8x16xf32> -> vector<8x16xf32>
    %345 = arith.addf %344, %11 : vector<8x16xf32>
    %346 = vector.broadcast %cst : f32 to vector<8x16xf32>
    %347 = arith.mulf %346, %345 : vector<8x16xf32>
    %348 = arith.addf %311, %347 : vector<8x16xf32>
    %cst_73 = arith.constant dense<0.000000e+00> : vector<8x32xf32>
    %349 = tpu.matmul %348, %1, %cst_73 {dimension_numbers = #tpu.dot_dimension_numbers<[1], [0], [0], [1], [0, 0, 1, 1], [], []>} : vector<8x16xf32>, vector<16x32xf32>, vector<8x32xf32> -> vector<8x32xf32>
    %350 = arith.addf %349, %324 : vector<8x32xf32>
    %351 = math.tanh %350 : vector<8x32xf32>
    %cst_74 = arith.constant dense<0.000000e+00> : vector<8x16xf32>
    %352 = tpu.matmul %351, %2, %cst_74 {dimension_numbers = #tpu.dot_dimension_numbers<[1], [0], [0], [1], [0, 0, 1, 1], [], []>} : vector<8x32xf32>, vector<32x16xf32>, vector<8x16xf32> -> vector<8x16xf32>
    %353 = arith.addf %352, %11 : vector<8x16xf32>
    %354 = arith.addf %337, %345 : vector<8x16xf32>
    %cst_75 = arith.constant 2.000000e+00 : f32
    %355 = vector.broadcast %cst_75 : f32 to vector<8x16xf32>
    %356 = arith.mulf %355, %354 : vector<8x16xf32>
    %357 = arith.addf %329, %356 : vector<8x16xf32>
    %358 = arith.addf %357, %353 : vector<8x16xf32>
    %359 = vector.broadcast %cst_12 : f32 to vector<8x16xf32>
    %360 = arith.mulf %359, %358 : vector<8x16xf32>
    %361 = arith.addf %311, %360 : vector<8x16xf32>
    %c7_i32 = arith.constant 7 : i32
    %362 = arith.sitofp %c7_i32 : i32 to f32
    %363 = arith.mulf %362, %cst : f32
    %364 = vector.broadcast %363 : f32 to vector<8x32xf32>
    %365 = arith.mulf %364, %5 : vector<8x32xf32>
    %366 = arith.addf %365, %8 : vector<8x32xf32>
    %367 = arith.addf %363, %cst_11 : f32
    %368 = vector.broadcast %367 : f32 to vector<8x32xf32>
    %369 = arith.mulf %368, %5 : vector<8x32xf32>
    %370 = arith.addf %369, %8 : vector<8x32xf32>
    %371 = arith.addf %363, %cst : f32
    %372 = vector.broadcast %371 : f32 to vector<8x32xf32>
    %373 = arith.mulf %372, %5 : vector<8x32xf32>
    %374 = arith.addf %373, %8 : vector<8x32xf32>
    %cst_76 = arith.constant dense<0.000000e+00> : vector<8x32xf32>
    %375 = tpu.matmul %361, %1, %cst_76 {dimension_numbers = #tpu.dot_dimension_numbers<[1], [0], [0], [1], [0, 0, 1, 1], [], []>} : vector<8x16xf32>, vector<16x32xf32>, vector<8x32xf32> -> vector<8x32xf32>
    %376 = arith.addf %375, %366 : vector<8x32xf32>
    %377 = math.tanh %376 : vector<8x32xf32>
    %cst_77 = arith.constant dense<0.000000e+00> : vector<8x16xf32>
    %378 = tpu.matmul %377, %2, %cst_77 {dimension_numbers = #tpu.dot_dimension_numbers<[1], [0], [0], [1], [0, 0, 1, 1], [], []>} : vector<8x32xf32>, vector<32x16xf32>, vector<8x16xf32> -> vector<8x16xf32>
    %379 = arith.addf %378, %11 : vector<8x16xf32>
    %380 = vector.broadcast %cst_11 : f32 to vector<8x16xf32>
    %381 = arith.mulf %380, %379 : vector<8x16xf32>
    %382 = arith.addf %361, %381 : vector<8x16xf32>
    %cst_78 = arith.constant dense<0.000000e+00> : vector<8x32xf32>
    %383 = tpu.matmul %382, %1, %cst_78 {dimension_numbers = #tpu.dot_dimension_numbers<[1], [0], [0], [1], [0, 0, 1, 1], [], []>} : vector<8x16xf32>, vector<16x32xf32>, vector<8x32xf32> -> vector<8x32xf32>
    %384 = arith.addf %383, %370 : vector<8x32xf32>
    %385 = math.tanh %384 : vector<8x32xf32>
    %cst_79 = arith.constant dense<0.000000e+00> : vector<8x16xf32>
    %386 = tpu.matmul %385, %2, %cst_79 {dimension_numbers = #tpu.dot_dimension_numbers<[1], [0], [0], [1], [0, 0, 1, 1], [], []>} : vector<8x32xf32>, vector<32x16xf32>, vector<8x16xf32> -> vector<8x16xf32>
    %387 = arith.addf %386, %11 : vector<8x16xf32>
    %388 = vector.broadcast %cst_11 : f32 to vector<8x16xf32>
    %389 = arith.mulf %388, %387 : vector<8x16xf32>
    %390 = arith.addf %361, %389 : vector<8x16xf32>
    %cst_80 = arith.constant dense<0.000000e+00> : vector<8x32xf32>
    %391 = tpu.matmul %390, %1, %cst_80 {dimension_numbers = #tpu.dot_dimension_numbers<[1], [0], [0], [1], [0, 0, 1, 1], [], []>} : vector<8x16xf32>, vector<16x32xf32>, vector<8x32xf32> -> vector<8x32xf32>
    %392 = arith.addf %391, %370 : vector<8x32xf32>
    %393 = math.tanh %392 : vector<8x32xf32>
    %cst_81 = arith.constant dense<0.000000e+00> : vector<8x16xf32>
    %394 = tpu.matmul %393, %2, %cst_81 {dimension_numbers = #tpu.dot_dimension_numbers<[1], [0], [0], [1], [0, 0, 1, 1], [], []>} : vector<8x32xf32>, vector<32x16xf32>, vector<8x16xf32> -> vector<8x16xf32>
    %395 = arith.addf %394, %11 : vector<8x16xf32>
    %396 = vector.broadcast %cst : f32 to vector<8x16xf32>
    %397 = arith.mulf %396, %395 : vector<8x16xf32>
    %398 = arith.addf %361, %397 : vector<8x16xf32>
    %cst_82 = arith.constant dense<0.000000e+00> : vector<8x32xf32>
    %399 = tpu.matmul %398, %1, %cst_82 {dimension_numbers = #tpu.dot_dimension_numbers<[1], [0], [0], [1], [0, 0, 1, 1], [], []>} : vector<8x16xf32>, vector<16x32xf32>, vector<8x32xf32> -> vector<8x32xf32>
    %400 = arith.addf %399, %374 : vector<8x32xf32>
    %401 = math.tanh %400 : vector<8x32xf32>
    %cst_83 = arith.constant dense<0.000000e+00> : vector<8x16xf32>
    %402 = tpu.matmul %401, %2, %cst_83 {dimension_numbers = #tpu.dot_dimension_numbers<[1], [0], [0], [1], [0, 0, 1, 1], [], []>} : vector<8x32xf32>, vector<32x16xf32>, vector<8x16xf32> -> vector<8x16xf32>
    %403 = arith.addf %402, %11 : vector<8x16xf32>
    %404 = arith.addf %387, %395 : vector<8x16xf32>
    %cst_84 = arith.constant 2.000000e+00 : f32
    %405 = vector.broadcast %cst_84 : f32 to vector<8x16xf32>
    %406 = arith.mulf %405, %404 : vector<8x16xf32>
    %407 = arith.addf %379, %406 : vector<8x16xf32>
    %408 = arith.addf %407, %403 : vector<8x16xf32>
    %409 = vector.broadcast %cst_12 : f32 to vector<8x16xf32>
    %410 = arith.mulf %409, %408 : vector<8x16xf32>
    %411 = arith.addf %361, %410 : vector<8x16xf32>
    %c8_i32 = arith.constant 8 : i32
    %c0_85 = arith.constant 0 : index
    %c0_86 = arith.constant 0 : index
    %412 = vector.load %arg7[%c0_85, %c0_86] : memref<8x16xf32, #tpu.memory_space<vmem>>, vector<8x16xf32>
    tpu.vector_store %arg7[%c0_85, %c0_86], %411 {strides = array<i32>} : memref<8x16xf32, #tpu.memory_space<vmem>>, vector<8x16xf32>,
    return
  }
  func.func @transform_0(%arg0: i32) -> (i32, i32) {
    %c0_i32 = arith.constant 0 : i32
    %c0_i32_0 = arith.constant 0 : i32
    return %arg0, %c0_i32 : i32, i32
  }
  func.func @transform_1(%arg0: i32) -> (i32, i32) {
    %c0_i32 = arith.constant 0 : i32
    %c0_i32_0 = arith.constant 0 : i32
    %c0_i32_1 = arith.constant 0 : i32
    return %c0_i32, %c0_i32_0 : i32, i32
  }
  func.func @transform_2(%arg0: i32) -> (i32, i32) {
    %c0_i32 = arith.constant 0 : i32
    %c0_i32_0 = arith.constant 0 : i32
    %c0_i32_1 = arith.constant 0 : i32
    return %c0_i32, %c0_i32_0 : i32, i32
  }
  func.func @transform_3(%arg0: i32) -> (i32, i32) {
    %c0_i32 = arith.constant 0 : i32
    %c0_i32_0 = arith.constant 0 : i32
    %c0_i32_1 = arith.constant 0 : i32
    return %c0_i32, %c0_i32_0 : i32, i32
  }
  func.func @transform_4(%arg0: i32) -> (i32, i32) {
    %c0_i32 = arith.constant 0 : i32
    %c0_i32_0 = arith.constant 0 : i32
    %c0_i32_1 = arith.constant 0 : i32
    return %c0_i32, %c0_i32_0 : i32, i32
  }
  func.func @transform_5(%arg0: i32) -> (i32, i32) {
    %c0_i32 = arith.constant 0 : i32
    %c0_i32_0 = arith.constant 0 : i32
    %c0_i32_1 = arith.constant 0 : i32
    return %c0_i32, %c0_i32_0 : i32, i32
  }
  func.func @transform_6(%arg0: i32) -> (i32, i32) {
    %c0_i32 = arith.constant 0 : i32
    %c0_i32_0 = arith.constant 0 : i32
    return %arg0, %c0_i32 : i32, i32
  }
}

</mosaic_0001>

<llo_original>
// kernel: tpu_custom_call.1
$region0: #{tpu_custom_call.1}
  #allocation0 [shape = 'u32[]', space=smem, size = 0x4, offset = 0x4, fixed_abs, tag = 'smem constant byte address 0x4 - core index']
  #allocation1 [shape = 'u32[72,128]{1,0:T(1,128)}', space=vmem, size = 0x9000, scoped, tag = 'internal scratch']
  %s0 = inlined_call_operand.vmem [shape: f32[8,16], index: 0, kind: input, shape index: {}]
  %s1 = inlined_call_operand.vmem [shape: f32[16,32], index: 1, kind: input, shape index: {}]
  %s2 = inlined_call_operand.vmem [shape: f32[1,32], index: 2, kind: input, shape index: {}]
  %s3 = inlined_call_operand.vmem [shape: f32[1,32], index: 3, kind: input, shape index: {}]
  %s4 = inlined_call_operand.vmem [shape: f32[32,16], index: 4, kind: input, shape index: {}]
  %s5 = inlined_call_operand.vmem [shape: f32[1,16], index: 5, kind: input, shape index: {}]
  %s6 = inlined_call_operand.hbm [shape: f32[8,16], index: 6, kind: output, shape index: {}]
  %s7 = sld [smem:[#allocation0]]
  $region34: #{tpu_custom_call.1} parent=0
    _
  %s9 = ssub.s32 1, %s7
  %s10 = scalar_select 0, %s9, %s7
  $region1: #{tpu_custom_call.1} parent=0
    #allocation2 [shape = 'u8[4096]{0}', space=vmem, size = 0x1000, scoped, tag = 'output window, operand 0, single buffered']
    #allocation3 [shape = 's32[1]{0}', space=sflag, size = 0x4, scoped, tag = 'scoped memory for tpu_custom_call.1']
    %11 = vsyncpa [#allocation3], 0
    // Predicated region
    $region2: #{tpu_custom_call.1} parent=1 // pred_check
      _
    $region3: #{tpu_custom_call.1} parent=1 // pred_check_branch
      %13 = sbr.rel (0) target = $region5
    $region4: #{tpu_custom_call.1} parent=1 // pred_region
      _
    $region5: #{tpu_custom_call.1} parent=1 // pred_fallthru
      _
    // Predicated region
    $region6: #{tpu_custom_call.1} parent=1 // pred_check
      _
    $region7: #{tpu_custom_call.1} parent=1 // pred_check_branch
      %15 = sbr.rel (0) target = $region9
    $region8: #{tpu_custom_call.1} parent=1 // pred_region
      _
    $region9: #{tpu_custom_call.1} parent=1 // pred_fallthru
      _
    // Predicated region
    $region10: #{tpu_custom_call.1} parent=1 // pred_check
      _
    $region11: #{tpu_custom_call.1} parent=1 // pred_check_branch
      %17 = sbr.rel (0) target = $region13
    $region12: #{tpu_custom_call.1} parent=1 // pred_region
      _
    $region13: #{tpu_custom_call.1} parent=1 // pred_fallthru
      _
    // Predicated region
    $region14: #{tpu_custom_call.1} parent=1 // pred_check
      _
    $region15: #{tpu_custom_call.1} parent=1 // pred_check_branch
      %19 = sbr.rel (0) target = $region17
    $region16: #{tpu_custom_call.1} parent=1 // pred_region
      _
    $region17: #{tpu_custom_call.1} parent=1 // pred_fallthru
      _
    // Predicated region
    $region18: #{tpu_custom_call.1} parent=1 // pred_check
      _
    $region19: #{tpu_custom_call.1} parent=1 // pred_check_branch
      %21 = sbr.rel (0) target = $region21
    $region20: #{tpu_custom_call.1} parent=1 // pred_region
      _
    $region21: #{tpu_custom_call.1} parent=1 // pred_fallthru
      _
    // Predicated region
    $region22: #{tpu_custom_call.1} parent=1 // pred_check
      _
    $region23: #{tpu_custom_call.1} parent=1 // pred_check_branch
      %23 = sbr.rel (0) target = $region25
    $region24: #{tpu_custom_call.1} parent=1 // pred_region
      _
    $region25: #{tpu_custom_call.1} parent=1 // pred_fallthru
      _
    %v24 = vld [vmem:[%s0] sm:$0xff]
    %v25 = vld [vmem:[%s1] sm:$0xff]
    %v26 = vld [vmem:[%s1 + $0x8] sm:$0xff]
    %v27 = vld [vmem:[%s4] sm:$0xff]
    %v28 = vld [vmem:[%s4 + $0x8] sm:$0xff]
    %v29 = vld [vmem:[%s4 + $0x10] sm:$0xff]
    %v30 = vld [vmem:[%s4 + $0x18] sm:$0xff]
    %v31 = vld [vmem:[%s2] sm:$0x1]
    %v33 = vperm.slane %v31, 0
    %v35 = vld [vmem:[%s3] sm:$0x1]
    %v37 = vperm.slane %v35, 0
    %v39 = vld [vmem:[%s5] sm:$0x1]
    %v41 = vperm.slane %v39, 0
    %v43 = vmul.f32 %v33, 0.0
    %v44 = vadd.f32 %v43, %v37
    %v45 = vmul.f32 %v33, 0.0625
    %v46 = vadd.f32 %v45, %v37
    %v47 = vmul.f32 %v33, 0.125
    %v48 = vadd.f32 %v47, %v37
    %vm49 = vcmask 130048
    %v51 = vsel %vm49, %v24, 0
    %53 = vmatpush.msra.mxu0 0.0
    %54 = vmatpush.msra.mxu0 0.0
    %55 = vmatpush.msra.mxu0 0.0
    %56 = vmatpush.msra.mxu0 0.0
    %57 = vmatpush.msra.mxu0 0.0
    %58 = vmatpush.msra.mxu0 0.0
    %59 = vmatpush.msra.mxu0 0.0
    %60 = vmatpush.msra.mxu0 0.0
    %61 = vmatpush.msra.mxu0 0.0
    %62 = vmatpush.msra.mxu0 0.0
    %63 = vmatpush.msra.mxu0 0.0
    %64 = vmatpush.msra.mxu0 0.0
    %65 = vmatpush.msra.mxu0 0.0
    %66 = vmatpush.msra.mxu0 0.0
    %67 = vmatpush.msra.mxu0 %v26
    %68 = vmatpush.msra.mxu0 %v25
    %69 = vmatmul.f32.gmra.mxu0 %v51
    %v70 = vpop.f32.mrf.mxu0
    %v71 = vadd.f32 %v44, %v70
    %72 = vdwg.mxu0
    %v73 = vtanh.pop %v71
    %vm74 = vcmask 261120
    %v76 = vsel %vm74, %v73, 0
    %78 = vmatpush.msra.mxu0 0.0
    %79 = vmatpush.msra.mxu0 0.0
    %80 = vmatpush.msra.mxu0 0.0
    %81 = vmatpush.msra.mxu0 0.0
    %82 = vmatpush.msra.mxu0 0.0
    %83 = vmatpush.msra.mxu0 0.0
    %84 = vmatpush.msra.mxu0 0.0
    %85 = vmatpush.msra.mxu0 0.0
    %86 = vmatpush.msra.mxu0 0.0
    %87 = vmatpush.msra.mxu0 0.0
    %88 = vmatpush.msra.mxu0 0.0
    %89 = vmatpush.msra.mxu0 0.0
    %90 = vmatpush.msra.mxu0 %v30
    %91 = vmatpush.msra.mxu0 %v29
    %92 = vmatpush.msra.mxu0 %v28
    %93 = vmatpush.msra.mxu0 %v27
    %94 = vmatmul.f32.gmra.mxu0 %v76
    %v95 = vpop.f32.mrf.mxu0
    %v96 = vadd.f32 %v41, %v95
    %97 = vdwg.mxu0
    %v98 = vmul.f32 %v96, 0.0625
    %v99 = vadd.f32 %v24, %v98
    %v101 = vsel %vm49, %v99, 0
    %103 = vmatpush.msra.mxu0 0.0
    %104 = vmatpush.msra.mxu0 0.0
    %105 = vmatpush.msra.mxu0 0.0
    %106 = vmatpush.msra.mxu0 0.0
    %107 = vmatpush.msra.mxu0 0.0
    %108 = vmatpush.msra.mxu0 0.0
    %109 = vmatpush.msra.mxu0 0.0
    %110 = vmatpush.msra.mxu0 0.0
    %111 = vmatpush.msra.mxu0 0.0
    %112 = vmatpush.msra.mxu0 0.0
    %113 = vmatpush.msra.mxu0 0.0
    %114 = vmatpush.msra.mxu0 0.0
    %115 = vmatpush.msra.mxu0 0.0
    %116 = vmatpush.msra.mxu0 0.0
    %117 = vmatpush.msra.mxu0 %v26
    %118 = vmatpush.msra.mxu0 %v25
    %119 = vmatmul.f32.gmra.mxu0 %v101
    %v120 = vpop.f32.mrf.mxu0
    %v121 = vadd.f32 %v46, %v120
    %122 = vdwg.mxu0
    %v123 = vtanh.pop %v121
    %v125 = vsel %vm74, %v123, 0
    %127 = vmatpush.msra.mxu0 0.0
    %128 = vmatpush.msra.mxu0 0.0
    %129 = vmatpush.msra.mxu0 0.0
    %130 = vmatpush.msra.mxu0 0.0
    %131 = vmatpush.msra.mxu0 0.0
    %132 = vmatpush.msra.mxu0 0.0
    %133 = vmatpush.msra.mxu0 0.0
    %134 = vmatpush.msra.mxu0 0.0
    %135 = vmatpush.msra.mxu0 0.0
    %136 = vmatpush.msra.mxu0 0.0
    %137 = vmatpush.msra.mxu0 0.0
    %138 = vmatpush.msra.mxu0 0.0
    %139 = vmatpush.msra.mxu0 %v30
    %140 = vmatpush.msra.mxu0 %v29
    %141 = vmatpush.msra.mxu0 %v28
    %142 = vmatpush.msra.mxu0 %v27
    %143 = vmatmul.f32.gmra.mxu0 %v125
    %v144 = vpop.f32.mrf.mxu0
    %v145 = vadd.f32 %v41, %v144
    %146 = vdwg.mxu0
    %v147 = vmul.f32 %v145, 0.0625
    %v148 = vadd.f32 %v24, %v147
    %v150 = vsel %vm49, %v148, 0
    %152 = vmatpush.msra.mxu0 0.0
    %153 = vmatpush.msra.mxu0 0.0
    %154 = vmatpush.msra.mxu0 0.0
    %155 = vmatpush.msra.mxu0 0.0
    %156 = vmatpush.msra.mxu0 0.0
    %157 = vmatpush.msra.mxu0 0.0
    %158 = vmatpush.msra.mxu0 0.0
    %159 = vmatpush.msra.mxu0 0.0
    %160 = vmatpush.msra.mxu0 0.0
    %161 = vmatpush.msra.mxu0 0.0
    %162 = vmatpush.msra.mxu0 0.0
    %163 = vmatpush.msra.mxu0 0.0
    %164 = vmatpush.msra.mxu0 0.0
    %165 = vmatpush.msra.mxu0 0.0
    %166 = vmatpush.msra.mxu0 %v26
    %167 = vmatpush.msra.mxu0 %v25
    %168 = vmatmul.f32.gmra.mxu0 %v150
    %v169 = vpop.f32.mrf.mxu0
    %v170 = vadd.f32 %v46, %v169
    %171 = vdwg.mxu0
    %v172 = vtanh.pop %v170
    %v174 = vsel %vm74, %v172, 0
    %176 = vmatpush.msra.mxu0 0.0
    %177 = vmatpush.msra.mxu0 0.0
    %178 = vmatpush.msra.mxu0 0.0
    %179 = vmatpush.msra.mxu0 0.0
    %180 = vmatpush.msra.mxu0 0.0
    %181 = vmatpush.msra.mxu0 0.0
    %182 = vmatpush.msra.mxu0 0.0
    %183 = vmatpush.msra.mxu0 0.0
    %184 = vmatpush.msra.mxu0 0.0
    %185 = vmatpush.msra.mxu0 0.0
    %186 = vmatpush.msra.mxu0 0.0
    %187 = vmatpush.msra.mxu0 0.0
    %188 = vmatpush.msra.mxu0 %v30
    %189 = vmatpush.msra.mxu0 %v29
    %190 = vmatpush.msra.mxu0 %v28
    %191 = vmatpush.msra.mxu0 %v27
    %192 = vmatmul.f32.gmra.mxu0 %v174
    %v193 = vpop.f32.mrf.mxu0
    %v194 = vadd.f32 %v41, %v193
    %195 = vdwg.mxu0
    %v196 = vmul.f32 %v194, 0.125
    %v197 = vadd.f32 %v24, %v196
    %v199 = vsel %vm49, %v197, 0
    %201 = vmatpush.msra.mxu0 0.0
    %202 = vmatpush.msra.mxu0 0.0
    %203 = vmatpush.msra.mxu0 0.0
    %204 = vmatpush.msra.mxu0 0.0
    %205 = vmatpush.msra.mxu0 0.0
    %206 = vmatpush.msra.mxu0 0.0
    %207 = vmatpush.msra.mxu0 0.0
    %208 = vmatpush.msra.mxu0 0.0
    %209 = vmatpush.msra.mxu0 0.0
    %210 = vmatpush.msra.mxu0 0.0
    %211 = vmatpush.msra.mxu0 0.0
    %212 = vmatpush.msra.mxu0 0.0
    %213 = vmatpush.msra.mxu0 0.0
    %214 = vmatpush.msra.mxu0 0.0
    %215 = vmatpush.msra.mxu0 %v26
    %216 = vmatpush.msra.mxu0 %v25
    %217 = vmatmul.f32.gmra.mxu0 %v199
    %v218 = vpop.f32.mrf.mxu0
    %v219 = vadd.f32 %v48, %v218
    %220 = vdwg.mxu0
    %v221 = vtanh.pop %v219
    %v223 = vsel %vm74, %v221, 0
    %225 = vmatpush.msra.mxu0 0.0
    %226 = vmatpush.msra.mxu0 0.0
    %227 = vmatpush.msra.mxu0 0.0
    %228 = vmatpush.msra.mxu0 0.0
    %229 = vmatpush.msra.mxu0 0.0
    %230 = vmatpush.msra.mxu0 0.0
    %231 = vmatpush.msra.mxu0 0.0
    %232 = vmatpush.msra.mxu0 0.0
    %233 = vmatpush.msra.mxu0 0.0
    %234 = vmatpush.msra.mxu0 0.0
    %235 = vmatpush.msra.mxu0 0.0
    %236 = vmatpush.msra.mxu0 0.0
    %237 = vmatpush.msra.mxu0 %v30
    %238 = vmatpush.msra.mxu0 %v29
    %239 = vmatpush.msra.mxu0 %v28
    %240 = vmatpush.msra.mxu0 %v27
    %241 = vmatmul.f32.gmra.mxu0 %v223
    %v242 = vpop.f32.mrf.mxu0
    %v243 = vadd.f32 %v41, %v242
    %244 = vdwg.mxu0
    %v245 = vadd.f32 %v145, %v194
    %v246 = vmul.f32 %v245, 2.0
    %v247 = vadd.f32 %v96, %v246
    %v248 = vadd.f32 %v247, %v243
    %v249 = vmul.f32 %v248, 0.020833334
    %v250 = vadd.f32 %v24, %v249
    %v251 = vmul.f32 %v33, 0.1875
    %v252 = vadd.f32 %v251, %v37
    %v253 = vmul.f32 %v33, 0.25
    %v254 = vadd.f32 %v253, %v37
    %v256 = vsel %vm49, %v250, 0
    %258 = vmatpush.msra.mxu0 0.0
    %259 = vmatpush.msra.mxu0 0.0
    %260 = vmatpush.msra.mxu0 0.0
    %261 = vmatpush.msra.mxu0 0.0
    %262 = vmatpush.msra.mxu0 0.0
    %263 = vmatpush.msra.mxu0 0.0
    %264 = vmatpush.msra.mxu0 0.0
    %265 = vmatpush.msra.mxu0 0.0
    %266 = vmatpush.msra.mxu0 0.0
    %267 = vmatpush.msra.mxu0 0.0
    %268 = vmatpush.msra.mxu0 0.0
    %269 = vmatpush.msra.mxu0 0.0
    %270 = vmatpush.msra.mxu0 0.0
    %271 = vmatpush.msra.mxu0 0.0
    %272 = vmatpush.msra.mxu0 %v26
    %273 = vmatpush.msra.mxu0 %v25
    %274 = vmatmul.f32.gmra.mxu0 %v256
    %v275 = vpop.f32.mrf.mxu0
    %v276 = vadd.f32 %v48, %v275
    %277 = vdwg.mxu0
    %v278 = vtanh.pop %v276
    %v280 = vsel %vm74, %v278, 0
    %282 = vmatpush.msra.mxu0 0.0
    %283 = vmatpush.msra.mxu0 0.0
    %284 = vmatpush.msra.mxu0 0.0
    %285 = vmatpush.msra.mxu0 0.0
    %286 = vmatpush.msra.mxu0 0.0
    %287 = vmatpush.msra.mxu0 0.0
    %288 = vmatpush.msra.mxu0 0.0
    %289 = vmatpush.msra.mxu0 0.0
    %290 = vmatpush.msra.mxu0 0.0
    %291 = vmatpush.msra.mxu0 0.0
    %292 = vmatpush.msra.mxu0 0.0
    %293 = vmatpush.msra.mxu0 0.0
    %294 = vmatpush.msra.mxu0 %v30
    %295 = vmatpush.msra.mxu0 %v29
    %296 = vmatpush.msra.mxu0 %v28
    %297 = vmatpush.msra.mxu0 %v27
    %298 = vmatmul.f32.gmra.mxu0 %v280
    %v299 = vpop.f32.mrf.mxu0
    %v300 = vadd.f32 %v41, %v299
    %301 = vdwg.mxu0
    %v302 = vmul.f32 %v300, 0.0625
    %v303 = vadd.f32 %v250, %v302
    %v305 = vsel %vm49, %v303, 0
    %307 = vmatpush.msra.mxu0 0.0
    %308 = vmatpush.msra.mxu0 0.0
    %309 = vmatpush.msra.mxu0 0.0
    %310 = vmatpush.msra.mxu0 0.0
    %311 = vmatpush.msra.mxu0 0.0
    %312 = vmatpush.msra.mxu0 0.0
    %313 = vmatpush.msra.mxu0 0.0
    %314 = vmatpush.msra.mxu0 0.0
    %315 = vmatpush.msra.mxu0 0.0
    %316 = vmatpush.msra.mxu0 0.0
    %317 = vmatpush.msra.mxu0 0.0
    %318 = vmatpush.msra.mxu0 0.0
    %319 = vmatpush.msra.mxu0 0.0
    %320 = vmatpush.msra.mxu0 0.0
    %321 = vmatpush.msra.mxu0 %v26
    %322 = vmatpush.msra.mxu0 %v25
    %323 = vmatmul.f32.gmra.mxu0 %v305
    %v324 = vpop.f32.mrf.mxu0
    %v325 = vadd.f32 %v252, %v324
    %326 = vdwg.mxu0
    %v327 = vtanh.pop %v325
    %v329 = vsel %vm74, %v327, 0
    %331 = vmatpush.msra.mxu0 0.0
    %332 = vmatpush.msra.mxu0 0.0
    %333 = vmatpush.msra.mxu0 0.0
    %334 = vmatpush.msra.mxu0 0.0
    %335 = vmatpush.msra.mxu0 0.0
    %336 = vmatpush.msra.mxu0 0.0
    %337 = vmatpush.msra.mxu0 0.0
    %338 = vmatpush.msra.mxu0 0.0
    %339 = vmatpush.msra.mxu0 0.0
    %340 = vmatpush.msra.mxu0 0.0
    %341 = vmatpush.msra.mxu0 0.0
    %342 = vmatpush.msra.mxu0 0.0
    %343 = vmatpush.msra.mxu0 %v30
    %344 = vmatpush.msra.mxu0 %v29
    %345 = vmatpush.msra.mxu0 %v28
    %346 = vmatpush.msra.mxu0 %v27
    %347 = vmatmul.f32.gmra.mxu0 %v329
    %v348 = vpop.f32.mrf.mxu0
    %v349 = vadd.f32 %v41, %v348
    %350 = vdwg.mxu0
    %v351 = vmul.f32 %v349, 0.0625
    %v352 = vadd.f32 %v250, %v351
    %v354 = vsel %vm49, %v352, 0
    %356 = vmatpush.msra.mxu0 0.0
    %357 = vmatpush.msra.mxu0 0.0
    %358 = vmatpush.msra.mxu0 0.0
    %359 = vmatpush.msra.mxu0 0.0
    %360 = vmatpush.msra.mxu0 0.0
    %361 = vmatpush.msra.mxu0 0.0
    %362 = vmatpush.msra.mxu0 0.0
    %363 = vmatpush.msra.mxu0 0.0
    %364 = vmatpush.msra.mxu0 0.0
    %365 = vmatpush.msra.mxu0 0.0
    %366 = vmatpush.msra.mxu0 0.0
    %367 = vmatpush.msra.mxu0 0.0
    %368 = vmatpush.msra.mxu0 0.0
    %369 = vmatpush.msra.mxu0 0.0
    %370 = vmatpush.msra.mxu0 %v26
    %371 = vmatpush.msra.mxu0 %v25
    %372 = vmatmul.f32.gmra.mxu0 %v354
    %v373 = vpop.f32.mrf.mxu0
    %v374 = vadd.f32 %v252, %v373
    %375 = vdwg.mxu0
    %v376 = vtanh.pop %v374
    %v378 = vsel %vm74, %v376, 0
    %380 = vmatpush.msra.mxu0 0.0
    %381 = vmatpush.msra.mxu0 0.0
    %382 = vmatpush.msra.mxu0 0.0
    %383 = vmatpush.msra.mxu0 0.0
    %384 = vmatpush.msra.mxu0 0.0
    %385 = vmatpush.msra.mxu0 0.0
    %386 = vmatpush.msra.mxu0 0.0
    %387 = vmatpush.msra.mxu0 0.0
    %388 = vmatpush.msra.mxu0 0.0
    %389 = vmatpush.msra.mxu0 0.0
    %390 = vmatpush.msra.mxu0 0.0
    %391 = vmatpush.msra.mxu0 0.0
    %392 = vmatpush.msra.mxu0 %v30
    %393 = vmatpush.msra.mxu0 %v29
    %394 = vmatpush.msra.mxu0 %v28
    %395 = vmatpush.msra.mxu0 %v27
    %396 = vmatmul.f32.gmra.mxu0 %v378
    %v397 = vpop.f32.mrf.mxu0
    %v398 = vadd.f32 %v41, %v397
    %399 = vdwg.mxu0
    %v400 = vmul.f32 %v398, 0.125
    %v401 = vadd.f32 %v250, %v400
    %v403 = vsel %vm49, %v401, 0
    %405 = vmatpush.msra.mxu0 0.0
    %406 = vmatpush.msra.mxu0 0.0
    %407 = vmatpush.msra.mxu0 0.0
    %408 = vmatpush.msra.mxu0 0.0
    %409 = vmatpush.msra.mxu0 0.0
    %410 = vmatpush.msra.mxu0 0.0
    %411 = vmatpush.msra.mxu0 0.0
    %412 = vmatpush.msra.mxu0 0.0
    %413 = vmatpush.msra.mxu0 0.0
    %414 = vmatpush.msra.mxu0 0.0
    %415 = vmatpush.msra.mxu0 0.0
    %416 = vmatpush.msra.mxu0 0.0
    %417 = vmatpush.msra.mxu0 0.0
    %418 = vmatpush.msra.mxu0 0.0
    %419 = vmatpush.msra.mxu0 %v26
    %420 = vmatpush.msra.mxu0 %v25
    %421 = vmatmul.f32.gmra.mxu0 %v403
    %v422 = vpop.f32.mrf.mxu0
    %v423 = vadd.f32 %v254, %v422
    %424 = vdwg.mxu0
    %v425 = vtanh.pop %v423
    %v427 = vsel %vm74, %v425, 0
    %429 = vmatpush.msra.mxu0 0.0
    %430 = vmatpush.msra.mxu0 0.0
    %431 = vmatpush.msra.mxu0 0.0
    %432 = vmatpush.msra.mxu0 0.0
    %433 = vmatpush.msra.mxu0 0.0
    %434 = vmatpush.msra.mxu0 0.0
    %435 = vmatpush.msra.mxu0 0.0
    %436 = vmatpush.msra.mxu0 0.0
    %437 = vmatpush.msra.mxu0 0.0
    %438 = vmatpush.msra.mxu0 0.0
    %439 = vmatpush.msra.mxu0 0.0
    %440 = vmatpush.msra.mxu0 0.0
    %441 = vmatpush.msra.mxu0 %v30
    %442 = vmatpush.msra.mxu0 %v29
    %443 = vmatpush.msra.mxu0 %v28
    %444 = vmatpush.msra.mxu0 %v27
    %445 = vmatmul.f32.gmra.mxu0 %v427
    %v446 = vpop.f32.mrf.mxu0
    %v447 = vadd.f32 %v41, %v446
    %448 = vdwg.mxu0
    %v449 = vadd.f32 %v349, %v398
    %v450 = vmul.f32 %v449, 2.0
    %v451 = vadd.f32 %v300, %v450
    %v452 = vadd.f32 %v451, %v447
    %v453 = vmul.f32 %v452, 0.020833334
    %v454 = vadd.f32 %v250, %v453
    %v455 = vmul.f32 %v33, 0.3125
    %v456 = vadd.f32 %v455, %v37
    %v457 = vmul.f32 %v33, 0.375
    %v458 = vadd.f32 %v457, %v37
    %v460 = vsel %vm49, %v454, 0
    %462 = vmatpush.msra.mxu0 0.0
    %463 = vmatpush.msra.mxu0 0.0
    %464 = vmatpush.msra.mxu0 0.0
    %465 = vmatpush.msra.mxu0 0.0
    %466 = vmatpush.msra.mxu0 0.0
    %467 = vmatpush.msra.mxu0 0.0
    %468 = vmatpush.msra.mxu0 0.0
    %469 = vmatpush.msra.mxu0 0.0
    %470 = vmatpush.msra.mxu0 0.0
    %471 = vmatpush.msra.mxu0 0.0
    %472 = vmatpush.msra.mxu0 0.0
    %473 = vmatpush.msra.mxu0 0.0
    %474 = vmatpush.msra.mxu0 0.0
    %475 = vmatpush.msra.mxu0 0.0
    %476 = vmatpush.msra.mxu0 %v26
    %477 = vmatpush.msra.mxu0 %v25
    %478 = vmatmul.f32.gmra.mxu0 %v460
    %v479 = vpop.f32.mrf.mxu0
    %v480 = vadd.f32 %v254, %v479
    %481 = vdwg.mxu0
    %v482 = vtanh.pop %v480
    %v484 = vsel %vm74, %v482, 0
    %486 = vmatpush.msra.mxu0 0.0
    %487 = vmatpush.msra.mxu0 0.0
    %488 = vmatpush.msra.mxu0 0.0
    %489 = vmatpush.msra.mxu0 0.0
    %490 = vmatpush.msra.mxu0 0.0
    %491 = vmatpush.msra.mxu0 0.0
    %492 = vmatpush.msra.mxu0 0.0
    %493 = vmatpush.msra.mxu0 0.0
    %494 = vmatpush.msra.mxu0 0.0
    %495 = vmatpush.msra.mxu0 0.0
    %496 = vmatpush.msra.mxu0 0.0
    %497 = vmatpush.msra.mxu0 0.0
    %498 = vmatpush.msra.mxu0 %v30
    %499 = vmatpush.msra.mxu0 %v29
    %500 = vmatpush.msra.mxu0 %v28
    %501 = vmatpush.msra.mxu0 %v27
    %502 = vmatmul.f32.gmra.mxu0 %v484
    %v503 = vpop.f32.mrf.mxu0
    %v504 = vadd.f32 %v41, %v503
    %505 = vdwg.mxu0
    %v506 = vmul.f32 %v504, 0.0625
    %v507 = vadd.f32 %v454, %v506
    %v509 = vsel %vm49, %v507, 0
    %511 = vmatpush.msra.mxu0 0.0
    %512 = vmatpush.msra.mxu0 0.0
    %513 = vmatpush.msra.mxu0 0.0
    %514 = vmatpush.msra.mxu0 0.0
    %515 = vmatpush.msra.mxu0 0.0
    %516 = vmatpush.msra.mxu0 0.0
    %517 = vmatpush.msra.mxu0 0.0
    %518 = vmatpush.msra.mxu0 0.0
    %519 = vmatpush.msra.mxu0 0.0
    %520 = vmatpush.msra.mxu0 0.0
    %521 = vmatpush.msra.mxu0 0.0
    %522 = vmatpush.msra.mxu0 0.0
    %523 = vmatpush.msra.mxu0 0.0
    %524 = vmatpush.msra.mxu0 0.0
    %525 = vmatpush.msra.mxu0 %v26
    %526 = vmatpush.msra.mxu0 %v25
    %527 = vmatmul.f32.gmra.mxu0 %v509
    %v528 = vpop.f32.mrf.mxu0
    %v529 = vadd.f32 %v456, %v528
    %530 = vdwg.mxu0
    %v531 = vtanh.pop %v529
    %v533 = vsel %vm74, %v531, 0
    %535 = vmatpush.msra.mxu0 0.0
    %536 = vmatpush.msra.mxu0 0.0
    %537 = vmatpush.msra.mxu0 0.0
    %538 = vmatpush.msra.mxu0 0.0
    %539 = vmatpush.msra.mxu0 0.0
    %540 = vmatpush.msra.mxu0 0.0
    %541 = vmatpush.msra.mxu0 0.0
    %542 = vmatpush.msra.mxu0 0.0
    %543 = vmatpush.msra.mxu0 0.0
    %544 = vmatpush.msra.mxu0 0.0
    %545 = vmatpush.msra.mxu0 0.0
    %546 = vmatpush.msra.mxu0 0.0
    %547 = vmatpush.msra.mxu0 %v30
    %548 = vmatpush.msra.mxu0 %v29
    %549 = vmatpush.msra.mxu0 %v28
    %550 = vmatpush.msra.mxu0 %v27
    %551 = vmatmul.f32.gmra.mxu0 %v533
    %v552 = vpop.f32.mrf.mxu0
    %v553 = vadd.f32 %v41, %v552
    %554 = vdwg.mxu0
    %v555 = vmul.f32 %v553, 0.0625
    %v556 = vadd.f32 %v454, %v555
    %v558 = vsel %vm49, %v556, 0
    %560 = vmatpush.msra.mxu0 0.0
    %561 = vmatpush.msra.mxu0 0.0
    %562 = vmatpush.msra.mxu0 0.0
    %563 = vmatpush.msra.mxu0 0.0
    %564 = vmatpush.msra.mxu0 0.0
    %565 = vmatpush.msra.mxu0 0.0
    %566 = vmatpush.msra.mxu0 0.0
    %567 = vmatpush.msra.mxu0 0.0
    %568 = vmatpush.msra.mxu0 0.0
    %569 = vmatpush.msra.mxu0 0.0
    %570 = vmatpush.msra.mxu0 0.0
    %571 = vmatpush.msra.mxu0 0.0
    %572 = vmatpush.msra.mxu0 0.0
    %573 = vmatpush.msra.mxu0 0.0
    %574 = vmatpush.msra.mxu0 %v26
    %575 = vmatpush.msra.mxu0 %v25
    %576 = vmatmul.f32.gmra.mxu0 %v558
    %v577 = vpop.f32.mrf.mxu0
    %v578 = vadd.f32 %v456, %v577
    %579 = vdwg.mxu0
    %v580 = vtanh.pop %v578
    %v582 = vsel %vm74, %v580, 0
    %584 = vmatpush.msra.mxu0 0.0
    %585 = vmatpush.msra.mxu0 0.0
    %586 = vmatpush.msra.mxu0 0.0
    %587 = vmatpush.msra.mxu0 0.0
    %588 = vmatpush.msra.mxu0 0.0
    %589 = vmatpush.msra.mxu0 0.0
    %590 = vmatpush.msra.mxu0 0.0
    %591 = vmatpush.msra.mxu0 0.0
    %592 = vmatpush.msra.mxu0 0.0
    %593 = vmatpush.msra.mxu0 0.0
    %594 = vmatpush.msra.mxu0 0.0
    %595 = vmatpush.msra.mxu0 0.0
    %596 = vmatpush.msra.mxu0 %v30
    %597 = vmatpush.msra.mxu0 %v29
    %598 = vmatpush.msra.mxu0 %v28
    %599 = vmatpush.msra.mxu0 %v27
    %600 = vmatmul.f32.gmra.mxu0 %v582
    %v601 = vpop.f32.mrf.mxu0
    %v602 = vadd.f32 %v41, %v601
    %603 = vdwg.mxu0
    %v604 = vmul.f32 %v602, 0.125
    %v605 = vadd.f32 %v454, %v604
    %v607 = vsel %vm49, %v605, 0
    %609 = vmatpush.msra.mxu0 0.0
    %610 = vmatpush.msra.mxu0 0.0
    %611 = vmatpush.msra.mxu0 0.0
    %612 = vmatpush.msra.mxu0 0.0
    %613 = vmatpush.msra.mxu0 0.0
    %614 = vmatpush.msra.mxu0 0.0
    %615 = vmatpush.msra.mxu0 0.0
    %616 = vmatpush.msra.mxu0 0.0
    %617 = vmatpush.msra.mxu0 0.0
    %618 = vmatpush.msra.mxu0 0.0
    %619 = vmatpush.msra.mxu0 0.0
    %620 = vmatpush.msra.mxu0 0.0
    %621 = vmatpush.msra.mxu0 0.0
    %622 = vmatpush.msra.mxu0 0.0
    %623 = vmatpush.msra.mxu0 %v26
    %624 = vmatpush.msra.mxu0 %v25
    %625 = vmatmul.f32.gmra.mxu0 %v607
    %v626 = vpop.f32.mrf.mxu0
    %v627 = vadd.f32 %v458, %v626
    %628 = vdwg.mxu0
    %v629 = vtanh.pop %v627
    %v631 = vsel %vm74, %v629, 0
    %633 = vmatpush.msra.mxu0 0.0
    %634 = vmatpush.msra.mxu0 0.0
    %635 = vmatpush.msra.mxu0 0.0
    %636 = vmatpush.msra.mxu0 0.0
    %637 = vmatpush.msra.mxu0 0.0
    %638 = vmatpush.msra.mxu0 0.0
    %639 = vmatpush.msra.mxu0 0.0
    %640 = vmatpush.msra.mxu0 0.0
    %641 = vmatpush.msra.mxu0 0.0
    %642 = vmatpush.msra.mxu0 0.0
    %643 = vmatpush.msra.mxu0 0.0
    %644 = vmatpush.msra.mxu0 0.0
    %645 = vmatpush.msra.mxu0 %v30
    %646 = vmatpush.msra.mxu0 %v29
    %647 = vmatpush.msra.mxu0 %v28
    %648 = vmatpush.msra.mxu0 %v27
    %649 = vmatmul.f32.gmra.mxu0 %v631
    %v650 = vpop.f32.mrf.mxu0
    %v651 = vadd.f32 %v41, %v650
    %652 = vdwg.mxu0
    %v653 = vadd.f32 %v553, %v602
    %v654 = vmul.f32 %v653, 2.0
    %v655 = vadd.f32 %v504, %v654
    %v656 = vadd.f32 %v655, %v651
    %v657 = vmul.f32 %v656, 0.020833334
    %v658 = vadd.f32 %v454, %v657
    %v659 = vmul.f32 %v33, 0.4375
    %v660 = vadd.f32 %v659, %v37
    %v661 = vmul.f32 %v33, 0.5
    %v662 = vadd.f32 %v661, %v37
    %v664 = vsel %vm49, %v658, 0
    %666 = vmatpush.msra.mxu0 0.0
    %667 = vmatpush.msra.mxu0 0.0
    %668 = vmatpush.msra.mxu0 0.0
    %669 = vmatpush.msra.mxu0 0.0
    %670 = vmatpush.msra.mxu0 0.0
    %671 = vmatpush.msra.mxu0 0.0
    %672 = vmatpush.msra.mxu0 0.0
    %673 = vmatpush.msra.mxu0 0.0
    %674 = vmatpush.msra.mxu0 0.0
    %675 = vmatpush.msra.mxu0 0.0
    %676 = vmatpush.msra.mxu0 0.0
    %677 = vmatpush.msra.mxu0 0.0
    %678 = vmatpush.msra.mxu0 0.0
    %679 = vmatpush.msra.mxu0 0.0
    %680 = vmatpush.msra.mxu0 %v26
    %681 = vmatpush.msra.mxu0 %v25
    %682 = vmatmul.f32.gmra.mxu0 %v664
    %v683 = vpop.f32.mrf.mxu0
    %v684 = vadd.f32 %v458, %v683
    %685 = vdwg.mxu0
    %v686 = vtanh.pop %v684
    %v688 = vsel %vm74, %v686, 0
    %690 = vmatpush.msra.mxu0 0.0
    %691 = vmatpush.msra.mxu0 0.0
    %692 = vmatpush.msra.mxu0 0.0
    %693 = vmatpush.msra.mxu0 0.0
    %694 = vmatpush.msra.mxu0 0.0
    %695 = vmatpush.msra.mxu0 0.0
    %696 = vmatpush.msra.mxu0 0.0
    %697 = vmatpush.msra.mxu0 0.0
    %698 = vmatpush.msra.mxu0 0.0
    %699 = vmatpush.msra.mxu0 0.0
    %700 = vmatpush.msra.mxu0 0.0
    %701 = vmatpush.msra.mxu0 0.0
    %702 = vmatpush.msra.mxu0 %v30
    %703 = vmatpush.msra.mxu0 %v29
    %704 = vmatpush.msra.mxu0 %v28
    %705 = vmatpush.msra.mxu0 %v27
    %706 = vmatmul.f32.gmra.mxu0 %v688
    %v707 = vpop.f32.mrf.mxu0
    %v708 = vadd.f32 %v41, %v707
    %709 = vdwg.mxu0
    %v710 = vmul.f32 %v708, 0.0625
    %v711 = vadd.f32 %v658, %v710
    %v713 = vsel %vm49, %v711, 0
    %715 = vmatpush.msra.mxu0 0.0
    %716 = vmatpush.msra.mxu0 0.0
    %717 = vmatpush.msra.mxu0 0.0
    %718 = vmatpush.msra.mxu0 0.0
    %719 = vmatpush.msra.mxu0 0.0
    %720 = vmatpush.msra.mxu0 0.0
    %721 = vmatpush.msra.mxu0 0.0
    %722 = vmatpush.msra.mxu0 0.0
    %723 = vmatpush.msra.mxu0 0.0
    %724 = vmatpush.msra.mxu0 0.0
    %725 = vmatpush.msra.mxu0 0.0
    %726 = vmatpush.msra.mxu0 0.0
    %727 = vmatpush.msra.mxu0 0.0
    %728 = vmatpush.msra.mxu0 0.0
    %729 = vmatpush.msra.mxu0 %v26
    %730 = vmatpush.msra.mxu0 %v25
    %731 = vmatmul.f32.gmra.mxu0 %v713
    %v732 = vpop.f32.mrf.mxu0
    %v733 = vadd.f32 %v660, %v732
    %734 = vdwg.mxu0
    %v735 = vtanh.pop %v733
    %v737 = vsel %vm74, %v735, 0
    %739 = vmatpush.msra.mxu0 0.0
    %740 = vmatpush.msra.mxu0 0.0
    %741 = vmatpush.msra.mxu0 0.0
    %742 = vmatpush.msra.mxu0 0.0
    %743 = vmatpush.msra.mxu0 0.0
    %744 = vmatpush.msra.mxu0 0.0
    %745 = vmatpush.msra.mxu0 0.0
    %746 = vmatpush.msra.mxu0 0.0
    %747 = vmatpush.msra.mxu0 0.0
    %748 = vmatpush.msra.mxu0 0.0
    %749 = vmatpush.msra.mxu0 0.0
    %750 = vmatpush.msra.mxu0 0.0
    %751 = vmatpush.msra.mxu0 %v30
    %752 = vmatpush.msra.mxu0 %v29
    %753 = vmatpush.msra.mxu0 %v28
    %754 = vmatpush.msra.mxu0 %v27
    %755 = vmatmul.f32.gmra.mxu0 %v737
    %v756 = vpop.f32.mrf.mxu0
    %v757 = vadd.f32 %v41, %v756
    %758 = vdwg.mxu0
    %v759 = vmul.f32 %v757, 0.0625
    %v760 = vadd.f32 %v658, %v759
    %v762 = vsel %vm49, %v760, 0
    %764 = vmatpush.msra.mxu0 0.0
    %765 = vmatpush.msra.mxu0 0.0
    %766 = vmatpush.msra.mxu0 0.0
    %767 = vmatpush.msra.mxu0 0.0
    %768 = vmatpush.msra.mxu0 0.0
    %769 = vmatpush.msra.mxu0 0.0
    %770 = vmatpush.msra.mxu0 0.0
    %771 = vmatpush.msra.mxu0 0.0
    %772 = vmatpush.msra.mxu0 0.0
    %773 = vmatpush.msra.mxu0 0.0
    %774 = vmatpush.msra.mxu0 0.0
    %775 = vmatpush.msra.mxu0 0.0
    %776 = vmatpush.msra.mxu0 0.0
    %777 = vmatpush.msra.mxu0 0.0
    %778 = vmatpush.msra.mxu0 %v26
    %779 = vmatpush.msra.mxu0 %v25
    %780 = vmatmul.f32.gmra.mxu0 %v762
    %v781 = vpop.f32.mrf.mxu0
    %v782 = vadd.f32 %v660, %v781
    %783 = vdwg.mxu0
    %v784 = vtanh.pop %v782
    %v786 = vsel %vm74, %v784, 0
    %788 = vmatpush.msra.mxu0 0.0
    %789 = vmatpush.msra.mxu0 0.0
    %790 = vmatpush.msra.mxu0 0.0
    %791 = vmatpush.msra.mxu0 0.0
    %792 = vmatpush.msra.mxu0 0.0
    %793 = vmatpush.msra.mxu0 0.0
    %794 = vmatpush.msra.mxu0 0.0
    %795 = vmatpush.msra.mxu0 0.0
    %796 = vmatpush.msra.mxu0 0.0
    %797 = vmatpush.msra.mxu0 0.0
    %798 = vmatpush.msra.mxu0 0.0
    %799 = vmatpush.msra.mxu0 0.0
    %800 = vmatpush.msra.mxu0 %v30
    %801 = vmatpush.msra.mxu0 %v29
    %802 = vmatpush.msra.mxu0 %v28
    %803 = vmatpush.msra.mxu0 %v27
    %804 = vmatmul.f32.gmra.mxu0 %v786
    %v805 = vpop.f32.mrf.mxu0
    %v806 = vadd.f32 %v41, %v805
    %807 = vdwg.mxu0
    %v808 = vmul.f32 %v806, 0.125
    %v809 = vadd.f32 %v658, %v808
    %v811 = vsel %vm49, %v809, 0
    %813 = vmatpush.msra.mxu0 0.0
    %814 = vmatpush.msra.mxu0 0.0
    %815 = vmatpush.msra.mxu0 0.0
    %816 = vmatpush.msra.mxu0 0.0
    %817 = vmatpush.msra.mxu0 0.0
    %818 = vmatpush.msra.mxu0 0.0
    %819 = vmatpush.msra.mxu0 0.0
    %820 = vmatpush.msra.mxu0 0.0
    %821 = vmatpush.msra.mxu0 0.0
    %822 = vmatpush.msra.mxu0 0.0
    %823 = vmatpush.msra.mxu0 0.0
    %824 = vmatpush.msra.mxu0 0.0
    %825 = vmatpush.msra.mxu0 0.0
    %826 = vmatpush.msra.mxu0 0.0
    %827 = vmatpush.msra.mxu0 %v26
    %828 = vmatpush.msra.mxu0 %v25
    %829 = vmatmul.f32.gmra.mxu0 %v811
    %v830 = vpop.f32.mrf.mxu0
    %v831 = vadd.f32 %v662, %v830
    %832 = vdwg.mxu0
    %v833 = vtanh.pop %v831
    %v835 = vsel %vm74, %v833, 0
    %837 = vmatpush.msra.mxu0 0.0
    %838 = vmatpush.msra.mxu0 0.0
    %839 = vmatpush.msra.mxu0 0.0
    %840 = vmatpush.msra.mxu0 0.0
    %841 = vmatpush.msra.mxu0 0.0
    %842 = vmatpush.msra.mxu0 0.0
    %843 = vmatpush.msra.mxu0 0.0
    %844 = vmatpush.msra.mxu0 0.0
    %845 = vmatpush.msra.mxu0 0.0
    %846 = vmatpush.msra.mxu0 0.0
    %847 = vmatpush.msra.mxu0 0.0
    %848 = vmatpush.msra.mxu0 0.0
    %849 = vmatpush.msra.mxu0 %v30
    %850 = vmatpush.msra.mxu0 %v29
    %851 = vmatpush.msra.mxu0 %v28
    %852 = vmatpush.msra.mxu0 %v27
    %853 = vmatmul.f32.gmra.mxu0 %v835
    %v854 = vpop.f32.mrf.mxu0
    %v855 = vadd.f32 %v41, %v854
    %856 = vdwg.mxu0
    %v857 = vadd.f32 %v757, %v806
    %v858 = vmul.f32 %v857, 2.0
    %v859 = vadd.f32 %v708, %v858
    %v860 = vadd.f32 %v859, %v855
    %v861 = vmul.f32 %v860, 0.020833334
    %v862 = vadd.f32 %v658, %v861
    %v863 = vmul.f32 %v33, 0.5625
    %v864 = vadd.f32 %v863, %v37
    %v865 = vmul.f32 %v33, 0.625
    %v866 = vadd.f32 %v865, %v37
    %v868 = vsel %vm49, %v862, 0
    %870 = vmatpush.msra.mxu0 0.0
    %871 = vmatpush.msra.mxu0 0.0
    %872 = vmatpush.msra.mxu0 0.0
    %873 = vmatpush.msra.mxu0 0.0
    %874 = vmatpush.msra.mxu0 0.0
    %875 = vmatpush.msra.mxu0 0.0
    %876 = vmatpush.msra.mxu0 0.0
    %877 = vmatpush.msra.mxu0 0.0
    %878 = vmatpush.msra.mxu0 0.0
    %879 = vmatpush.msra.mxu0 0.0
    %880 = vmatpush.msra.mxu0 0.0
    %881 = vmatpush.msra.mxu0 0.0
    %882 = vmatpush.msra.mxu0 0.0
    %883 = vmatpush.msra.mxu0 0.0
    %884 = vmatpush.msra.mxu0 %v26
    %885 = vmatpush.msra.mxu0 %v25
    %886 = vmatmul.f32.gmra.mxu0 %v868
    %v887 = vpop.f32.mrf.mxu0
    %v888 = vadd.f32 %v662, %v887
    %889 = vdwg.mxu0
    %v890 = vtanh.pop %v888
    %v892 = vsel %vm74, %v890, 0
    %894 = vmatpush.msra.mxu0 0.0
    %895 = vmatpush.msra.mxu0 0.0
    %896 = vmatpush.msra.mxu0 0.0
    %897 = vmatpush.msra.mxu0 0.0
    %898 = vmatpush.msra.mxu0 0.0
    %899 = vmatpush.msra.mxu0 0.0
    %900 = vmatpush.msra.mxu0 0.0
    %901 = vmatpush.msra.mxu0 0.0
    %902 = vmatpush.msra.mxu0 0.0
    %903 = vmatpush.msra.mxu0 0.0
    %904 = vmatpush.msra.mxu0 0.0
    %905 = vmatpush.msra.mxu0 0.0
    %906 = vmatpush.msra.mxu0 %v30
    %907 = vmatpush.msra.mxu0 %v29
    %908 = vmatpush.msra.mxu0 %v28
    %909 = vmatpush.msra.mxu0 %v27
    %910 = vmatmul.f32.gmra.mxu0 %v892
    %v911 = vpop.f32.mrf.mxu0
    %v912 = vadd.f32 %v41, %v911
    %913 = vdwg.mxu0
    %v914 = vmul.f32 %v912, 0.0625
    %v915 = vadd.f32 %v862, %v914
    %v917 = vsel %vm49, %v915, 0
    %919 = vmatpush.msra.mxu0 0.0
    %920 = vmatpush.msra.mxu0 0.0
    %921 = vmatpush.msra.mxu0 0.0
    %922 = vmatpush.msra.mxu0 0.0
    %923 = vmatpush.msra.mxu0 0.0
    %924 = vmatpush.msra.mxu0 0.0
    %925 = vmatpush.msra.mxu0 0.0
    %926 = vmatpush.msra.mxu0 0.0
    %927 = vmatpush.msra.mxu0 0.0
    %928 = vmatpush.msra.mxu0 0.0
    %929 = vmatpush.msra.mxu0 0.0
    %930 = vmatpush.msra.mxu0 0.0
    %931 = vmatpush.msra.mxu0 0.0
    %932 = vmatpush.msra.mxu0 0.0
    %933 = vmatpush.msra.mxu0 %v26
    %934 = vmatpush.msra.mxu0 %v25
    %935 = vmatmul.f32.gmra.mxu0 %v917
    %v936 = vpop.f32.mrf.mxu0
    %v937 = vadd.f32 %v864, %v936
    %938 = vdwg.mxu0
    %v939 = vtanh.pop %v937
    %v941 = vsel %vm74, %v939, 0
    %943 = vmatpush.msra.mxu0 0.0
    %944 = vmatpush.msra.mxu0 0.0
    %945 = vmatpush.msra.mxu0 0.0
    %946 = vmatpush.msra.mxu0 0.0
    %947 = vmatpush.msra.mxu0 0.0
    %948 = vmatpush.msra.mxu0 0.0
    %949 = vmatpush.msra.mxu0 0.0
    %950 = vmatpush.msra.mxu0 0.0
    %951 = vmatpush.msra.mxu0 0.0
    %952 = vmatpush.msra.mxu0 0.0
    %953 = vmatpush.msra.mxu0 0.0
    %954 = vmatpush.msra.mxu0 0.0
    %955 = vmatpush.msra.mxu0 %v30
    %956 = vmatpush.msra.mxu0 %v29
    %957 = vmatpush.msra.mxu0 %v28
    %958 = vmatpush.msra.mxu0 %v27
    %959 = vmatmul.f32.gmra.mxu0 %v941
    %v960 = vpop.f32.mrf.mxu0
    %v961 = vadd.f32 %v41, %v960
    %962 = vdwg.mxu0
    %v963 = vmul.f32 %v961, 0.0625
    %v964 = vadd.f32 %v862, %v963
    %v966 = vsel %vm49, %v964, 0
    %968 = vmatpush.msra.mxu0 0.0
    %969 = vmatpush.msra.mxu0 0.0
    %970 = vmatpush.msra.mxu0 0.0
    %971 = vmatpush.msra.mxu0 0.0
    %972 = vmatpush.msra.mxu0 0.0
    %973 = vmatpush.msra.mxu0 0.0
    %974 = vmatpush.msra.mxu0 0.0
    %975 = vmatpush.msra.mxu0 0.0
    %976 = vmatpush.msra.mxu0 0.0
    %977 = vmatpush.msra.mxu0 0.0
    %978 = vmatpush.msra.mxu0 0.0
    %979 = vmatpush.msra.mxu0 0.0
    %980 = vmatpush.msra.mxu0 0.0
    %981 = vmatpush.msra.mxu0 0.0
    %982 = vmatpush.msra.mxu0 %v26
    %983 = vmatpush.msra.mxu0 %v25
    %984 = vmatmul.f32.gmra.mxu0 %v966
    %v985 = vpop.f32.mrf.mxu0
    %v986 = vadd.f32 %v864, %v985
    %987 = vdwg.mxu0
    %v988 = vtanh.pop %v986
    %v990 = vsel %vm74, %v988, 0
    %992 = vmatpush.msra.mxu0 0.0
    %993 = vmatpush.msra.mxu0 0.0
    %994 = vmatpush.msra.mxu0 0.0
    %995 = vmatpush.msra.mxu0 0.0
    %996 = vmatpush.msra.mxu0 0.0
    %997 = vmatpush.msra.mxu0 0.0
    %998 = vmatpush.msra.mxu0 0.0
    %999 = vmatpush.msra.mxu0 0.0
    %1000 = vmatpush.msra.mxu0 0.0
    %1001 = vmatpush.msra.mxu0 0.0
    %1002 = vmatpush.msra.mxu0 0.0
    %1003 = vmatpush.msra.mxu0 0.0
    %1004 = vmatpush.msra.mxu0 %v30
    %1005 = vmatpush.msra.mxu0 %v29
    %1006 = vmatpush.msra.mxu0 %v28
    %1007 = vmatpush.msra.mxu0 %v27
    %1008 = vmatmul.f32.gmra.mxu0 %v990
    %v1009 = vpop.f32.mrf.mxu0
    %v1010 = vadd.f32 %v41, %v1009
    %1011 = vdwg.mxu0
    %v1012 = vmul.f32 %v1010, 0.125
    %v1013 = vadd.f32 %v862, %v1012
    %v1015 = vsel %vm49, %v1013, 0
    %1017 = vmatpush.msra.mxu0 0.0
    %1018 = vmatpush.msra.mxu0 0.0
    %1019 = vmatpush.msra.mxu0 0.0
    %1020 = vmatpush.msra.mxu0 0.0
    %1021 = vmatpush.msra.mxu0 0.0
    %1022 = vmatpush.msra.mxu0 0.0
    %1023 = vmatpush.msra.mxu0 0.0
    %1024 = vmatpush.msra.mxu0 0.0
    %1025 = vmatpush.msra.mxu0 0.0
    %1026 = vmatpush.msra.mxu0 0.0
    %1027 = vmatpush.msra.mxu0 0.0
    %1028 = vmatpush.msra.mxu0 0.0
    %1029 = vmatpush.msra.mxu0 0.0
    %1030 = vmatpush.msra.mxu0 0.0
    %1031 = vmatpush.msra.mxu0 %v26
    %1032 = vmatpush.msra.mxu0 %v25
    %1033 = vmatmul.f32.gmra.mxu0 %v1015
    %v1034 = vpop.f32.mrf.mxu0
    %v1035 = vadd.f32 %v866, %v1034
    %1036 = vdwg.mxu0
    %v1037 = vtanh.pop %v1035
    %v1039 = vsel %vm74, %v1037, 0
    %1041 = vmatpush.msra.mxu0 0.0
    %1042 = vmatpush.msra.mxu0 0.0
    %1043 = vmatpush.msra.mxu0 0.0
    %1044 = vmatpush.msra.mxu0 0.0
    %1045 = vmatpush.msra.mxu0 0.0
    %1046 = vmatpush.msra.mxu0 0.0
    %1047 = vmatpush.msra.mxu0 0.0
    %1048 = vmatpush.msra.mxu0 0.0
    %1049 = vmatpush.msra.mxu0 0.0
    %1050 = vmatpush.msra.mxu0 0.0
    %1051 = vmatpush.msra.mxu0 0.0
    %1052 = vmatpush.msra.mxu0 0.0
    %1053 = vmatpush.msra.mxu0 %v30
    %1054 = vmatpush.msra.mxu0 %v29
    %1055 = vmatpush.msra.mxu0 %v28
    %1056 = vmatpush.msra.mxu0 %v27
    %1057 = vmatmul.f32.gmra.mxu0 %v1039
    %v1058 = vpop.f32.mrf.mxu0
    %v1059 = vadd.f32 %v41, %v1058
    %1060 = vdwg.mxu0
    %v1061 = vadd.f32 %v961, %v1010
    %v1062 = vmul.f32 %v1061, 2.0
    %v1063 = vadd.f32 %v912, %v1062
    %v1064 = vadd.f32 %v1063, %v1059
    %v1065 = vmul.f32 %v1064, 0.020833334
    %v1066 = vadd.f32 %v862, %v1065
    %v1067 = vmul.f32 %v33, 0.6875
    %v1068 = vadd.f32 %v1067, %v37
    %v1069 = vmul.f32 %v33, 0.75
    %v1070 = vadd.f32 %v1069, %v37
    %v1072 = vsel %vm49, %v1066, 0
    %1074 = vmatpush.msra.mxu0 0.0
    %1075 = vmatpush.msra.mxu0 0.0
    %1076 = vmatpush.msra.mxu0 0.0
    %1077 = vmatpush.msra.mxu0 0.0
    %1078 = vmatpush.msra.mxu0 0.0
    %1079 = vmatpush.msra.mxu0 0.0
    %1080 = vmatpush.msra.mxu0 0.0
    %1081 = vmatpush.msra.mxu0 0.0
    %1082 = vmatpush.msra.mxu0 0.0
    %1083 = vmatpush.msra.mxu0 0.0
    %1084 = vmatpush.msra.mxu0 0.0
    %1085 = vmatpush.msra.mxu0 0.0
    %1086 = vmatpush.msra.mxu0 0.0
    %1087 = vmatpush.msra.mxu0 0.0
    %1088 = vmatpush.msra.mxu0 %v26
    %1089 = vmatpush.msra.mxu0 %v25
    %1090 = vmatmul.f32.gmra.mxu0 %v1072
    %v1091 = vpop.f32.mrf.mxu0
    %v1092 = vadd.f32 %v866, %v1091
    %1093 = vdwg.mxu0
    %v1094 = vtanh.pop %v1092
    %v1096 = vsel %vm74, %v1094, 0
    %1098 = vmatpush.msra.mxu0 0.0
    %1099 = vmatpush.msra.mxu0 0.0
    %1100 = vmatpush.msra.mxu0 0.0
    %1101 = vmatpush.msra.mxu0 0.0
    %1102 = vmatpush.msra.mxu0 0.0
    %1103 = vmatpush.msra.mxu0 0.0
    %1104 = vmatpush.msra.mxu0 0.0
    %1105 = vmatpush.msra.mxu0 0.0
    %1106 = vmatpush.msra.mxu0 0.0
    %1107 = vmatpush.msra.mxu0 0.0
    %1108 = vmatpush.msra.mxu0 0.0
    %1109 = vmatpush.msra.mxu0 0.0
    %1110 = vmatpush.msra.mxu0 %v30
    %1111 = vmatpush.msra.mxu0 %v29
    %1112 = vmatpush.msra.mxu0 %v28
    %1113 = vmatpush.msra.mxu0 %v27
    %1114 = vmatmul.f32.gmra.mxu0 %v1096
    %v1115 = vpop.f32.mrf.mxu0
    %v1116 = vadd.f32 %v41, %v1115
    %1117 = vdwg.mxu0
    %v1118 = vmul.f32 %v1116, 0.0625
    %v1119 = vadd.f32 %v1066, %v1118
    %v1121 = vsel %vm49, %v1119, 0
    %1123 = vmatpush.msra.mxu0 0.0
    %1124 = vmatpush.msra.mxu0 0.0
    %1125 = vmatpush.msra.mxu0 0.0
    %1126 = vmatpush.msra.mxu0 0.0
    %1127 = vmatpush.msra.mxu0 0.0
    %1128 = vmatpush.msra.mxu0 0.0
    %1129 = vmatpush.msra.mxu0 0.0
    %1130 = vmatpush.msra.mxu0 0.0
    %1131 = vmatpush.msra.mxu0 0.0
    %1132 = vmatpush.msra.mxu0 0.0
    %1133 = vmatpush.msra.mxu0 0.0
    %1134 = vmatpush.msra.mxu0 0.0
    %1135 = vmatpush.msra.mxu0 0.0
    %1136 = vmatpush.msra.mxu0 0.0
    %1137 = vmatpush.msra.mxu0 %v26
    %1138 = vmatpush.msra.mxu0 %v25
    %1139 = vmatmul.f32.gmra.mxu0 %v1121
    %v1140 = vpop.f32.mrf.mxu0
    %v1141 = vadd.f32 %v1068, %v1140
    %1142 = vdwg.mxu0
    %v1143 = vtanh.pop %v1141
    %v1145 = vsel %vm74, %v1143, 0
    %1147 = vmatpush.msra.mxu0 0.0
    %1148 = vmatpush.msra.mxu0 0.0
    %1149 = vmatpush.msra.mxu0 0.0
    %1150 = vmatpush.msra.mxu0 0.0
    %1151 = vmatpush.msra.mxu0 0.0
    %1152 = vmatpush.msra.mxu0 0.0
    %1153 = vmatpush.msra.mxu0 0.0
    %1154 = vmatpush.msra.mxu0 0.0
    %1155 = vmatpush.msra.mxu0 0.0
    %1156 = vmatpush.msra.mxu0 0.0
    %1157 = vmatpush.msra.mxu0 0.0
    %1158 = vmatpush.msra.mxu0 0.0
    %1159 = vmatpush.msra.mxu0 %v30
    %1160 = vmatpush.msra.mxu0 %v29
    %1161 = vmatpush.msra.mxu0 %v28
    %1162 = vmatpush.msra.mxu0 %v27
    %1163 = vmatmul.f32.gmra.mxu0 %v1145
    %v1164 = vpop.f32.mrf.mxu0
    %v1165 = vadd.f32 %v41, %v1164
    %1166 = vdwg.mxu0
    %v1167 = vmul.f32 %v1165, 0.0625
    %v1168 = vadd.f32 %v1066, %v1167
    %v1170 = vsel %vm49, %v1168, 0
    %1172 = vmatpush.msra.mxu0 0.0
    %1173 = vmatpush.msra.mxu0 0.0
    %1174 = vmatpush.msra.mxu0 0.0
    %1175 = vmatpush.msra.mxu0 0.0
    %1176 = vmatpush.msra.mxu0 0.0
    %1177 = vmatpush.msra.mxu0 0.0
    %1178 = vmatpush.msra.mxu0 0.0
    %1179 = vmatpush.msra.mxu0 0.0
    %1180 = vmatpush.msra.mxu0 0.0
    %1181 = vmatpush.msra.mxu0 0.0
    %1182 = vmatpush.msra.mxu0 0.0
    %1183 = vmatpush.msra.mxu0 0.0
    %1184 = vmatpush.msra.mxu0 0.0
    %1185 = vmatpush.msra.mxu0 0.0
    %1186 = vmatpush.msra.mxu0 %v26
    %1187 = vmatpush.msra.mxu0 %v25
    %1188 = vmatmul.f32.gmra.mxu0 %v1170
    %v1189 = vpop.f32.mrf.mxu0
    %v1190 = vadd.f32 %v1068, %v1189
    %1191 = vdwg.mxu0
    %v1192 = vtanh.pop %v1190
    %v1194 = vsel %vm74, %v1192, 0
    %1196 = vmatpush.msra.mxu0 0.0
    %1197 = vmatpush.msra.mxu0 0.0
    %1198 = vmatpush.msra.mxu0 0.0
    %1199 = vmatpush.msra.mxu0 0.0
    %1200 = vmatpush.msra.mxu0 0.0
    %1201 = vmatpush.msra.mxu0 0.0
    %1202 = vmatpush.msra.mxu0 0.0
    %1203 = vmatpush.msra.mxu0 0.0
    %1204 = vmatpush.msra.mxu0 0.0
    %1205 = vmatpush.msra.mxu0 0.0
    %1206 = vmatpush.msra.mxu0 0.0
    %1207 = vmatpush.msra.mxu0 0.0
    %1208 = vmatpush.msra.mxu0 %v30
    %1209 = vmatpush.msra.mxu0 %v29
    %1210 = vmatpush.msra.mxu0 %v28
    %1211 = vmatpush.msra.mxu0 %v27
    %1212 = vmatmul.f32.gmra.mxu0 %v1194
    %v1213 = vpop.f32.mrf.mxu0
    %v1214 = vadd.f32 %v41, %v1213
    %1215 = vdwg.mxu0
    %v1216 = vmul.f32 %v1214, 0.125
    %v1217 = vadd.f32 %v1066, %v1216
    %v1219 = vsel %vm49, %v1217, 0
    %1221 = vmatpush.msra.mxu0 0.0
    %1222 = vmatpush.msra.mxu0 0.0
    %1223 = vmatpush.msra.mxu0 0.0
    %1224 = vmatpush.msra.mxu0 0.0
    %1225 = vmatpush.msra.mxu0 0.0
    %1226 = vmatpush.msra.mxu0 0.0
    %1227 = vmatpush.msra.mxu0 0.0
    %1228 = vmatpush.msra.mxu0 0.0
    %1229 = vmatpush.msra.mxu0 0.0
    %1230 = vmatpush.msra.mxu0 0.0
    %1231 = vmatpush.msra.mxu0 0.0
    %1232 = vmatpush.msra.mxu0 0.0
    %1233 = vmatpush.msra.mxu0 0.0
    %1234 = vmatpush.msra.mxu0 0.0
    %1235 = vmatpush.msra.mxu0 %v26
    %1236 = vmatpush.msra.mxu0 %v25
    %1237 = vmatmul.f32.gmra.mxu0 %v1219
    %v1238 = vpop.f32.mrf.mxu0
    %v1239 = vadd.f32 %v1070, %v1238
    %1240 = vdwg.mxu0
    %v1241 = vtanh.pop %v1239
    %v1243 = vsel %vm74, %v1241, 0
    %1245 = vmatpush.msra.mxu0 0.0
    %1246 = vmatpush.msra.mxu0 0.0
    %1247 = vmatpush.msra.mxu0 0.0
    %1248 = vmatpush.msra.mxu0 0.0
    %1249 = vmatpush.msra.mxu0 0.0
    %1250 = vmatpush.msra.mxu0 0.0
    %1251 = vmatpush.msra.mxu0 0.0
    %1252 = vmatpush.msra.mxu0 0.0
    %1253 = vmatpush.msra.mxu0 0.0
    %1254 = vmatpush.msra.mxu0 0.0
    %1255 = vmatpush.msra.mxu0 0.0
    %1256 = vmatpush.msra.mxu0 0.0
    %1257 = vmatpush.msra.mxu0 %v30
    %1258 = vmatpush.msra.mxu0 %v29
    %1259 = vmatpush.msra.mxu0 %v28
    %1260 = vmatpush.msra.mxu0 %v27
    %1261 = vmatmul.f32.gmra.mxu0 %v1243
    %v1262 = vpop.f32.mrf.mxu0
    %v1263 = vadd.f32 %v41, %v1262
    %1264 = vdwg.mxu0
    %v1265 = vadd.f32 %v1165, %v1214
    %v1266 = vmul.f32 %v1265, 2.0
    %v1267 = vadd.f32 %v1116, %v1266
    %v1268 = vadd.f32 %v1267, %v1263
    %v1269 = vmul.f32 %v1268, 0.020833334
    %v1270 = vadd.f32 %v1066, %v1269
    %v1271 = vmul.f32 %v33, 0.8125
    %v1272 = vadd.f32 %v1271, %v37
    %v1273 = vmul.f32 %v33, 0.875
    %v1274 = vadd.f32 %v1273, %v37
    %v1276 = vsel %vm49, %v1270, 0
    %1278 = vmatpush.msra.mxu0 0.0
    %1279 = vmatpush.msra.mxu0 0.0
    %1280 = vmatpush.msra.mxu0 0.0
    %1281 = vmatpush.msra.mxu0 0.0
    %1282 = vmatpush.msra.mxu0 0.0
    %1283 = vmatpush.msra.mxu0 0.0
    %1284 = vmatpush.msra.mxu0 0.0
    %1285 = vmatpush.msra.mxu0 0.0
    %1286 = vmatpush.msra.mxu0 0.0
    %1287 = vmatpush.msra.mxu0 0.0
    %1288 = vmatpush.msra.mxu0 0.0
    %1289 = vmatpush.msra.mxu0 0.0
    %1290 = vmatpush.msra.mxu0 0.0
    %1291 = vmatpush.msra.mxu0 0.0
    %1292 = vmatpush.msra.mxu0 %v26
    %1293 = vmatpush.msra.mxu0 %v25
    %1294 = vmatmul.f32.gmra.mxu0 %v1276
    %v1295 = vpop.f32.mrf.mxu0
    %v1296 = vadd.f32 %v1070, %v1295
    %1297 = vdwg.mxu0
    %v1298 = vtanh.pop %v1296
    %v1300 = vsel %vm74, %v1298, 0
    %1302 = vmatpush.msra.mxu0 0.0
    %1303 = vmatpush.msra.mxu0 0.0
    %1304 = vmatpush.msra.mxu0 0.0
    %1305 = vmatpush.msra.mxu0 0.0
    %1306 = vmatpush.msra.mxu0 0.0
    %1307 = vmatpush.msra.mxu0 0.0
    %1308 = vmatpush.msra.mxu0 0.0
    %1309 = vmatpush.msra.mxu0 0.0
    %1310 = vmatpush.msra.mxu0 0.0
    %1311 = vmatpush.msra.mxu0 0.0
    %1312 = vmatpush.msra.mxu0 0.0
    %1313 = vmatpush.msra.mxu0 0.0
    %1314 = vmatpush.msra.mxu0 %v30
    %1315 = vmatpush.msra.mxu0 %v29
    %1316 = vmatpush.msra.mxu0 %v28
    %1317 = vmatpush.msra.mxu0 %v27
    %1318 = vmatmul.f32.gmra.mxu0 %v1300
    %v1319 = vpop.f32.mrf.mxu0
    %v1320 = vadd.f32 %v41, %v1319
    %1321 = vdwg.mxu0
    %v1322 = vmul.f32 %v1320, 0.0625
    %v1323 = vadd.f32 %v1270, %v1322
    %v1325 = vsel %vm49, %v1323, 0
    %1327 = vmatpush.msra.mxu0 0.0
    %1328 = vmatpush.msra.mxu0 0.0
    %1329 = vmatpush.msra.mxu0 0.0
    %1330 = vmatpush.msra.mxu0 0.0
    %1331 = vmatpush.msra.mxu0 0.0
    %1332 = vmatpush.msra.mxu0 0.0
    %1333 = vmatpush.msra.mxu0 0.0
    %1334 = vmatpush.msra.mxu0 0.0
    %1335 = vmatpush.msra.mxu0 0.0
    %1336 = vmatpush.msra.mxu0 0.0
    %1337 = vmatpush.msra.mxu0 0.0
    %1338 = vmatpush.msra.mxu0 0.0
    %1339 = vmatpush.msra.mxu0 0.0
    %1340 = vmatpush.msra.mxu0 0.0
    %1341 = vmatpush.msra.mxu0 %v26
    %1342 = vmatpush.msra.mxu0 %v25
    %1343 = vmatmul.f32.gmra.mxu0 %v1325
    %v1344 = vpop.f32.mrf.mxu0
    %v1345 = vadd.f32 %v1272, %v1344
    %1346 = vdwg.mxu0
    %v1347 = vtanh.pop %v1345
    %v1349 = vsel %vm74, %v1347, 0
    %1351 = vmatpush.msra.mxu0 0.0
    %1352 = vmatpush.msra.mxu0 0.0
    %1353 = vmatpush.msra.mxu0 0.0
    %1354 = vmatpush.msra.mxu0 0.0
    %1355 = vmatpush.msra.mxu0 0.0
    %1356 = vmatpush.msra.mxu0 0.0
    %1357 = vmatpush.msra.mxu0 0.0
    %1358 = vmatpush.msra.mxu0 0.0
    %1359 = vmatpush.msra.mxu0 0.0
    %1360 = vmatpush.msra.mxu0 0.0
    %1361 = vmatpush.msra.mxu0 0.0
    %1362 = vmatpush.msra.mxu0 0.0
    %1363 = vmatpush.msra.mxu0 %v30
    %1364 = vmatpush.msra.mxu0 %v29
    %1365 = vmatpush.msra.mxu0 %v28
    %1366 = vmatpush.msra.mxu0 %v27
    %1367 = vmatmul.f32.gmra.mxu0 %v1349
    %v1368 = vpop.f32.mrf.mxu0
    %v1369 = vadd.f32 %v41, %v1368
    %1370 = vdwg.mxu0
    %v1371 = vmul.f32 %v1369, 0.0625
    %v1372 = vadd.f32 %v1270, %v1371
    %v1374 = vsel %vm49, %v1372, 0
    %1376 = vmatpush.msra.mxu0 0.0
    %1377 = vmatpush.msra.mxu0 0.0
    %1378 = vmatpush.msra.mxu0 0.0
    %1379 = vmatpush.msra.mxu0 0.0
    %1380 = vmatpush.msra.mxu0 0.0
    %1381 = vmatpush.msra.mxu0 0.0
    %1382 = vmatpush.msra.mxu0 0.0
    %1383 = vmatpush.msra.mxu0 0.0
    %1384 = vmatpush.msra.mxu0 0.0
    %1385 = vmatpush.msra.mxu0 0.0
    %1386 = vmatpush.msra.mxu0 0.0
    %1387 = vmatpush.msra.mxu0 0.0
    %1388 = vmatpush.msra.mxu0 0.0
    %1389 = vmatpush.msra.mxu0 0.0
    %1390 = vmatpush.msra.mxu0 %v26
    %1391 = vmatpush.msra.mxu0 %v25
    %1392 = vmatmul.f32.gmra.mxu0 %v1374
    %v1393 = vpop.f32.mrf.mxu0
    %v1394 = vadd.f32 %v1272, %v1393
    %1395 = vdwg.mxu0
    %v1396 = vtanh.pop %v1394
    %v1398 = vsel %vm74, %v1396, 0
    %1400 = vmatpush.msra.mxu0 0.0
    %1401 = vmatpush.msra.mxu0 0.0
    %1402 = vmatpush.msra.mxu0 0.0
    %1403 = vmatpush.msra.mxu0 0.0
    %1404 = vmatpush.msra.mxu0 0.0
    %1405 = vmatpush.msra.mxu0 0.0
    %1406 = vmatpush.msra.mxu0 0.0
    %1407 = vmatpush.msra.mxu0 0.0
    %1408 = vmatpush.msra.mxu0 0.0
    %1409 = vmatpush.msra.mxu0 0.0
    %1410 = vmatpush.msra.mxu0 0.0
    %1411 = vmatpush.msra.mxu0 0.0
    %1412 = vmatpush.msra.mxu0 %v30
    %1413 = vmatpush.msra.mxu0 %v29
    %1414 = vmatpush.msra.mxu0 %v28
    %1415 = vmatpush.msra.mxu0 %v27
    %1416 = vmatmul.f32.gmra.mxu0 %v1398
    %v1417 = vpop.f32.mrf.mxu0
    %v1418 = vadd.f32 %v41, %v1417
    %1419 = vdwg.mxu0
    %v1420 = vmul.f32 %v1418, 0.125
    %v1421 = vadd.f32 %v1270, %v1420
    %v1423 = vsel %vm49, %v1421, 0
    %1425 = vmatpush.msra.mxu0 0.0
    %1426 = vmatpush.msra.mxu0 0.0
    %1427 = vmatpush.msra.mxu0 0.0
    %1428 = vmatpush.msra.mxu0 0.0
    %1429 = vmatpush.msra.mxu0 0.0
    %1430 = vmatpush.msra.mxu0 0.0
    %1431 = vmatpush.msra.mxu0 0.0
    %1432 = vmatpush.msra.mxu0 0.0
    %1433 = vmatpush.msra.mxu0 0.0
    %1434 = vmatpush.msra.mxu0 0.0
    %1435 = vmatpush.msra.mxu0 0.0
    %1436 = vmatpush.msra.mxu0 0.0
    %1437 = vmatpush.msra.mxu0 0.0
    %1438 = vmatpush.msra.mxu0 0.0
    %1439 = vmatpush.msra.mxu0 %v26
    %1440 = vmatpush.msra.mxu0 %v25
    %1441 = vmatmul.f32.gmra.mxu0 %v1423
    %v1442 = vpop.f32.mrf.mxu0
    %v1443 = vadd.f32 %v1274, %v1442
    %1444 = vdwg.mxu0
    %v1445 = vtanh.pop %v1443
    %v1447 = vsel %vm74, %v1445, 0
    %1449 = vmatpush.msra.mxu0 0.0
    %1450 = vmatpush.msra.mxu0 0.0
    %1451 = vmatpush.msra.mxu0 0.0
    %1452 = vmatpush.msra.mxu0 0.0
    %1453 = vmatpush.msra.mxu0 0.0
    %1454 = vmatpush.msra.mxu0 0.0
    %1455 = vmatpush.msra.mxu0 0.0
    %1456 = vmatpush.msra.mxu0 0.0
    %1457 = vmatpush.msra.mxu0 0.0
    %1458 = vmatpush.msra.mxu0 0.0
    %1459 = vmatpush.msra.mxu0 0.0
    %1460 = vmatpush.msra.mxu0 0.0
    %1461 = vmatpush.msra.mxu0 %v30
    %1462 = vmatpush.msra.mxu0 %v29
    %1463 = vmatpush.msra.mxu0 %v28
    %1464 = vmatpush.msra.mxu0 %v27
    %1465 = vmatmul.f32.gmra.mxu0 %v1447
    %v1466 = vpop.f32.mrf.mxu0
    %v1467 = vadd.f32 %v41, %v1466
    %1468 = vdwg.mxu0
    %v1469 = vadd.f32 %v1369, %v1418
    %v1470 = vmul.f32 %v1469, 2.0
    %v1471 = vadd.f32 %v1320, %v1470
    %v1472 = vadd.f32 %v1471, %v1467
    %v1473 = vmul.f32 %v1472, 0.020833334
    %v1474 = vadd.f32 %v1270, %v1473
    %v1475 = vmul.f32 %v33, 0.9375
    %v1476 = vadd.f32 %v1475, %v37
    %v1477 = vadd.f32 %v33, %v37
    %v1479 = vsel %vm49, %v1474, 0
    %1481 = vmatpush.msra.mxu0 0.0
    %1482 = vmatpush.msra.mxu0 0.0
    %1483 = vmatpush.msra.mxu0 0.0
    %1484 = vmatpush.msra.mxu0 0.0
    %1485 = vmatpush.msra.mxu0 0.0
    %1486 = vmatpush.msra.mxu0 0.0
    %1487 = vmatpush.msra.mxu0 0.0
    %1488 = vmatpush.msra.mxu0 0.0
    %1489 = vmatpush.msra.mxu0 0.0
    %1490 = vmatpush.msra.mxu0 0.0
    %1491 = vmatpush.msra.mxu0 0.0
    %1492 = vmatpush.msra.mxu0 0.0
    %1493 = vmatpush.msra.mxu0 0.0
    %1494 = vmatpush.msra.mxu0 0.0
    %1495 = vmatpush.msra.mxu0 %v26
    %1496 = vmatpush.msra.mxu0 %v25
    %1497 = vmatmul.f32.gmra.mxu0 %v1479
    %v1498 = vpop.f32.mrf.mxu0
    %v1499 = vadd.f32 %v1274, %v1498
    %1500 = vdwg.mxu0
    %v1501 = vtanh.pop %v1499
    %v1503 = vsel %vm74, %v1501, 0
    %1505 = vmatpush.msra.mxu0 0.0
    %1506 = vmatpush.msra.mxu0 0.0
    %1507 = vmatpush.msra.mxu0 0.0
    %1508 = vmatpush.msra.mxu0 0.0
    %1509 = vmatpush.msra.mxu0 0.0
    %1510 = vmatpush.msra.mxu0 0.0
    %1511 = vmatpush.msra.mxu0 0.0
    %1512 = vmatpush.msra.mxu0 0.0
    %1513 = vmatpush.msra.mxu0 0.0
    %1514 = vmatpush.msra.mxu0 0.0
    %1515 = vmatpush.msra.mxu0 0.0
    %1516 = vmatpush.msra.mxu0 0.0
    %1517 = vmatpush.msra.mxu0 %v30
    %1518 = vmatpush.msra.mxu0 %v29
    %1519 = vmatpush.msra.mxu0 %v28
    %1520 = vmatpush.msra.mxu0 %v27
    %1521 = vmatmul.f32.gmra.mxu0 %v1503
    %v1522 = vpop.f32.mrf.mxu0
    %v1523 = vadd.f32 %v41, %v1522
    %1524 = vdwg.mxu0
    %v1525 = vmul.f32 %v1523, 0.0625
    %v1526 = vadd.f32 %v1474, %v1525
    %v1528 = vsel %vm49, %v1526, 0
    %1530 = vmatpush.msra.mxu0 0.0
    %1531 = vmatpush.msra.mxu0 0.0
    %1532 = vmatpush.msra.mxu0 0.0
    %1533 = vmatpush.msra.mxu0 0.0
    %1534 = vmatpush.msra.mxu0 0.0
    %1535 = vmatpush.msra.mxu0 0.0
    %1536 = vmatpush.msra.mxu0 0.0
    %1537 = vmatpush.msra.mxu0 0.0
    %1538 = vmatpush.msra.mxu0 0.0
    %1539 = vmatpush.msra.mxu0 0.0
    %1540 = vmatpush.msra.mxu0 0.0
    %1541 = vmatpush.msra.mxu0 0.0
    %1542 = vmatpush.msra.mxu0 0.0
    %1543 = vmatpush.msra.mxu0 0.0
    %1544 = vmatpush.msra.mxu0 %v26
    %1545 = vmatpush.msra.mxu0 %v25
    %1546 = vmatmul.f32.gmra.mxu0 %v1528
    %v1547 = vpop.f32.mrf.mxu0
    %v1548 = vadd.f32 %v1476, %v1547
    %1549 = vdwg.mxu0
    %v1550 = vtanh.pop %v1548
    %v1552 = vsel %vm74, %v1550, 0
    %1554 = vmatpush.msra.mxu0 0.0
    %1555 = vmatpush.msra.mxu0 0.0
    %1556 = vmatpush.msra.mxu0 0.0
    %1557 = vmatpush.msra.mxu0 0.0
    %1558 = vmatpush.msra.mxu0 0.0
    %1559 = vmatpush.msra.mxu0 0.0
    %1560 = vmatpush.msra.mxu0 0.0
    %1561 = vmatpush.msra.mxu0 0.0
    %1562 = vmatpush.msra.mxu0 0.0
    %1563 = vmatpush.msra.mxu0 0.0
    %1564 = vmatpush.msra.mxu0 0.0
    %1565 = vmatpush.msra.mxu0 0.0
    %1566 = vmatpush.msra.mxu0 %v30
    %1567 = vmatpush.msra.mxu0 %v29
    %1568 = vmatpush.msra.mxu0 %v28
    %1569 = vmatpush.msra.mxu0 %v27
    %1570 = vmatmul.f32.gmra.mxu0 %v1552
    %v1571 = vpop.f32.mrf.mxu0
    %v1572 = vadd.f32 %v41, %v1571
    %1573 = vdwg.mxu0
    %v1574 = vmul.f32 %v1572, 0.0625
    %v1575 = vadd.f32 %v1474, %v1574
    %v1577 = vsel %vm49, %v1575, 0
    %1579 = vmatpush.msra.mxu0 0.0
    %1580 = vmatpush.msra.mxu0 0.0
    %1581 = vmatpush.msra.mxu0 0.0
    %1582 = vmatpush.msra.mxu0 0.0
    %1583 = vmatpush.msra.mxu0 0.0
    %1584 = vmatpush.msra.mxu0 0.0
    %1585 = vmatpush.msra.mxu0 0.0
    %1586 = vmatpush.msra.mxu0 0.0
    %1587 = vmatpush.msra.mxu0 0.0
    %1588 = vmatpush.msra.mxu0 0.0
    %1589 = vmatpush.msra.mxu0 0.0
    %1590 = vmatpush.msra.mxu0 0.0
    %1591 = vmatpush.msra.mxu0 0.0
    %1592 = vmatpush.msra.mxu0 0.0
    %1593 = vmatpush.msra.mxu0 %v26
    %1594 = vmatpush.msra.mxu0 %v25
    %1595 = vmatmul.f32.gmra.mxu0 %v1577
    %v1596 = vpop.f32.mrf.mxu0
    %v1597 = vadd.f32 %v1476, %v1596
    %1598 = vdwg.mxu0
    %v1599 = vtanh.pop %v1597
    %v1601 = vsel %vm74, %v1599, 0
    %1603 = vmatpush.msra.mxu0 0.0
    %1604 = vmatpush.msra.mxu0 0.0
    %1605 = vmatpush.msra.mxu0 0.0
    %1606 = vmatpush.msra.mxu0 0.0
    %1607 = vmatpush.msra.mxu0 0.0
    %1608 = vmatpush.msra.mxu0 0.0
    %1609 = vmatpush.msra.mxu0 0.0
    %1610 = vmatpush.msra.mxu0 0.0
    %1611 = vmatpush.msra.mxu0 0.0
    %1612 = vmatpush.msra.mxu0 0.0
    %1613 = vmatpush.msra.mxu0 0.0
    %1614 = vmatpush.msra.mxu0 0.0
    %1615 = vmatpush.msra.mxu0 %v30
    %1616 = vmatpush.msra.mxu0 %v29
    %1617 = vmatpush.msra.mxu0 %v28
    %1618 = vmatpush.msra.mxu0 %v27
    %1619 = vmatmul.f32.gmra.mxu0 %v1601
    %v1620 = vpop.f32.mrf.mxu0
    %v1621 = vadd.f32 %v41, %v1620
    %1622 = vdwg.mxu0
    %v1623 = vmul.f32 %v1621, 0.125
    %v1624 = vadd.f32 %v1474, %v1623
    %v1626 = vsel %vm49, %v1624, 0
    %1628 = vmatpush.msra.mxu0 0.0
    %1629 = vmatpush.msra.mxu0 0.0
    %1630 = vmatpush.msra.mxu0 0.0
    %1631 = vmatpush.msra.mxu0 0.0
    %1632 = vmatpush.msra.mxu0 0.0
    %1633 = vmatpush.msra.mxu0 0.0
    %1634 = vmatpush.msra.mxu0 0.0
    %1635 = vmatpush.msra.mxu0 0.0
    %1636 = vmatpush.msra.mxu0 0.0
    %1637 = vmatpush.msra.mxu0 0.0
    %1638 = vmatpush.msra.mxu0 0.0
    %1639 = vmatpush.msra.mxu0 0.0
    %1640 = vmatpush.msra.mxu0 0.0
    %1641 = vmatpush.msra.mxu0 0.0
    %1642 = vmatpush.msra.mxu0 %v26
    %1643 = vmatpush.msra.mxu0 %v25
    %1644 = vmatmul.f32.gmra.mxu0 %v1626
    %v1645 = vpop.f32.mrf.mxu0
    %v1646 = vadd.f32 %v1477, %v1645
    %1647 = vdwg.mxu0
    %v1648 = vtanh.pop %v1646
    %v1650 = vsel %vm74, %v1648, 0
    %1652 = vmatpush.msra.mxu0 0.0
    %1653 = vmatpush.msra.mxu0 0.0
    %1654 = vmatpush.msra.mxu0 0.0
    %1655 = vmatpush.msra.mxu0 0.0
    %1656 = vmatpush.msra.mxu0 0.0
    %1657 = vmatpush.msra.mxu0 0.0
    %1658 = vmatpush.msra.mxu0 0.0
    %1659 = vmatpush.msra.mxu0 0.0
    %1660 = vmatpush.msra.mxu0 0.0
    %1661 = vmatpush.msra.mxu0 0.0
    %1662 = vmatpush.msra.mxu0 0.0
    %1663 = vmatpush.msra.mxu0 0.0
    %1664 = vmatpush.msra.mxu0 %v30
    %1665 = vmatpush.msra.mxu0 %v29
    %1666 = vmatpush.msra.mxu0 %v28
    %1667 = vmatpush.msra.mxu0 %v27
    %1668 = vmatmul.f32.gmra.mxu0 %v1650
    %v1669 = vpop.f32.mrf.mxu0
    %v1670 = vadd.f32 %v41, %v1669
    %1671 = vdwg.mxu0
    %v1672 = vadd.f32 %v1572, %v1621
    %v1673 = vmul.f32 %v1672, 2.0
    %v1674 = vadd.f32 %v1523, %v1673
    %v1675 = vadd.f32 %v1674, %v1670
    %v1676 = vmul.f32 %v1675, 0.020833334
    %v1677 = vadd.f32 %v1474, %v1676
    %1678 = vst.msk [vmem:[#allocation2] sm:$0xff] %vm49, %v1677
    // Predicated region
    $region26: #{tpu_custom_call.1} parent=1 // pred_check
      _
    $region27: #{tpu_custom_call.1} parent=1 // pred_check_branch
      %1680 = sbr.rel (0) target = $region29
    $region28: #{tpu_custom_call.1} parent=1 // pred_region
      %1682 = vsyncadd [#allocation3], 0
      %s1684 = sshll.u32 [#allocation2], 4
      %s1685 = int_to_ptr.vmem [resolvable:$true] %s1684
      %s1686 = sshll.u32 %s6, 4
      %s1687 = int_to_ptr.hbm [resolvable:$true] %s1686
      %1689 = dma.vmem_to_hbm [thread:$0]  %s1685, 128, %s1687, [#allocation3]
    $region29: #{tpu_custom_call.1} parent=1 // pred_fallthru
      _
    // Predicated region
    $region30: #{tpu_custom_call.1} parent=1 // pred_check
      _
    $region31: #{tpu_custom_call.1} parent=1 // pred_check_branch
      %1691 = sbr.rel (0) target = $region33
    $region32: #{tpu_custom_call.1} parent=1 // pred_region
      %1693 = dma.done [#allocation3], 128
    $region33: #{tpu_custom_call.1} parent=1 // pred_fallthru
      _
    %1694 = vsyncpa [#allocation3], 1

</llo_original>
